<compile_context>
chip_gen: v5e
topology: v5e:2x2
jax: 0.10.0
libtpu: 0.0.40
codegen_flags: <defaults>
</compile_context>

<pallas_src>
import jax
import jax.numpy as jnp
import numpy as np
from jax import lax
from jax.experimental import pallas as pl
from jax.experimental.pallas import tpu as pltpu

SIG1 = 0.7310585786300049  # sigmoid(1.0): value of every "nonzero" bool entry in the torch code


def _round_up(x, m):
    return ((x + m - 1) // m) * m


def _vmem_budgets():
    """(adjacency-panel budget, vmem_limit_bytes) per TPU generation.

    Conservative (safe for 64 MiB/TC VMEM, i.e. v7x) unless a 128-MiB-VMEM generation
    (v5e / v5p / v6e) is positively detected from the device kind string.
    """
    kind = ""
    try:
        kind = jax.devices()[0].device_kind.lower()
    except Exception:
        pass
    if ("v5" in kind) or ("v6" in kind):
        return 40 * 1024 * 1024, 96 * 1024 * 1024
    return 20 * 1024 * 1024, 48 * 1024 * 1024


def _plan_tiles(n, panel_budget):
    """Returns (T, TK, npad).

    T:   (a, b) tile edge.  512 for large graphs; min(512, npad//2) so na >= 2 when possible.
    TK:  reduction (neighborhood) chunk.  TK = npad (panel resident across the inner j loop)
         when two double-buffered bf16 (T, TK) panels fit the per-generation budget,
         otherwise the largest 128-multiple divisor of npad that fits.
    """
    npad = _round_up(max(n, 1), 128)
    if npad <= 256:
        t = 128
    else:
        t = min(512, max(128, ((npad // 2) // 128) * 128))
    npad = _round_up(npad, t)

    tk = t
    for nk in range(1, npad // 128 + 1):
        if npad % nk:
            continue
        cand = npad // nk
        if cand % 128:
            continue
        if 4 * t * cand * 2 <= panel_budget:  # adj_a + adj_b, double-buffered, bf16
            tk = cand
            break
    return t, tk, npad


def _eloss_kernel(yoh_a_ref, u_a_ref, yoh_b_ref, e_b_ref,
                  adj_a_ref, adj_b_ref, adj_ab_ref, rowsum_ref, diag_ref,
                  t_ref, ssub_ref, sint_ref,
                  ci_acc):
    j = pl.program_id(1)
    k = pl.program_id(2)
    nk = pl.num_programs(2)
    f32 = jnp.float32
    bf16 = jnp.bfloat16
    dn = (((1,), (1,)), ((), ()))   # a @ b.T
    d0 = (((0,), (0,)), ((), ()))   # a.T @ b
    ds = (((1,), (0,)), ((), ()))   # a @ b

    # ---- per-a-tile init: zero the resident (C, C) output accumulators ----
    @pl.when(jnp.logical_and(j == 0, k == 0))
    def _():
        t_ref[...] = jnp.zeros_like(t_ref)
        ssub_ref[...] = jnp.zeros_like(ssub_ref)
        sint_ref[...] = jnp.zeros_like(sint_ref)

    # ---- CI accumulation over the k (neighborhood) axis ----
    # nk == 1 in the common case (whole adjacency row panel resident in VMEM).
    @pl.when(k == 0)
    def _():
        ci_acc[...] = jnp.zeros_like(ci_acc)

    ci_acc[...] += lax.dot_general(adj_a_ref[...], adj_b_ref[...], dn,
                                   preferred_element_type=f32)

    # ---- fused epilogue for this (a, b) tile at the last k step ----
    @pl.when(k == nk - 1)
    def _():
        ta = yoh_a_ref.shape[0]
        cpd = yoh_a_ref.shape[1]

        CI = ci_acc[...]                                   # exact neighbor-intersection counts
        A_ab = adj_ab_ref[...].astype(f32)                 # (T, T)
        # CS derived algebraically from CI (adj_self differs from adj only on the diagonal):
        # CS[a,b] = rowsum(A)[a] - CI[a,b] - A[a,b] * (1 - diag(A)[b])
        CS = rowsum_ref[...] - CI - A_ab * (1.0 - diag_ref[...])

        yoh_a = yoh_a_ref[...]
        yoh_b = yoh_b_ref[...]

        # ---- S_sub / S_int first, so cs_pos / ci_pos die before v / M1 are built ----
        # 0/1 indicators -> bf16 matmuls (exact for 0/1 operands; f32 accumulation).
        # The two chains share their RHS (fused along M) and the outer matmul is fused
        # along N (Cp + Cp = 256 output lanes -> fills a 256-wide MXU on v6e / v7x).
        # Results are only used as "> 0" gates, so bf16 rounding of counts > 256 is harmless.
        pos2 = jnp.concatenate([(CS > 0.0).astype(bf16), (CI > 0.0).astype(bf16)], axis=0)
        inner2 = lax.dot_general(pos2, yoh_b.astype(bf16), ds,
                                 preferred_element_type=f32)                 # (2T, Cp)
        inner_cat = jnp.concatenate([inner2[:ta], inner2[ta:]], axis=1)      # (T, 2Cp)
        outer2 = lax.dot_general(yoh_a.astype(bf16), inner_cat.astype(bf16), d0,
                                 preferred_element_type=f32)                 # (Cp, 2Cp)
        ssub_ref[...] += outer2[:, :cpd][None]
        sint_ref[...] += outer2[:, cpd:][None]

        # ---- exp-GAUC term (kept in f32 for accuracy of the final loss) ----
        # v = 1 - sigmoid((1+s*CS)/(1+s*CI))  ==  sigmoid(-(1+s*CS) * rcp(1+s*CI))
        inv = pl.reciprocal(1.0 + SIG1 * CI, approx=True)
        v = jax.nn.sigmoid(-(1.0 + SIG1 * CS) * inv)
        # T[i,j] += sum_{a,b} exp(-g*(pred[a,i]-pred[b,i])) * v[a,b] * yoh_a[a,i] * yoh_b[b,j]
        # with U_a = yoh_a * exp(-g*(pred_a - shift)), E_b = exp(g*(pred_b - shift)) precomputed.
        M1 = lax.dot_general(v, u_a_ref[...], d0, preferred_element_type=f32)   # (T_b, Cp)
        M2 = M1 * e_b_ref[...]
        t_ref[...] += lax.dot_general(M2, yoh_b, d0, preferred_element_type=f32)[None]


def eloss_forward(preds, labels, mask, adj_matrix, num_classes, gamma=1.0, per=0.8):
    """JAX/Pallas equivalent of ELossFN.forward (ExpGAUC, is_ner_weight=True)."""
    n, c = preds.shape
    assert c == num_classes
    f32 = jnp.float32

    panel_budget, vmem_limit = _vmem_budgets()
    T, TK, npad = _plan_tiles(n, panel_budget)
    cp = _round_up(max(num_classes, 1), 128)

    maskf = mask.astype(f32).reshape(n, 1)
    yoh = jax.nn.one_hot(labels, num_classes, dtype=f32) * maskf
    predf = preds.astype(f32)

    # Factorized exponentials with a per-class midpoint shift (cancels exactly in the
    # product exp(-g*(pa - s)) * exp(g*(pb - s)) and keeps both factors in f32 range).
    shift = 0.5 * (jnp.max(predf, axis=0, keepdims=True) + jnp.min(predf, axis=0, keepdims=True))
    U = yoh * jnp.exp(-gamma * (predf - shift))
    E = jnp.exp(gamma * (predf - shift))

    adjf = adj_matrix.astype(f32)
    rowsum = jnp.sum(adjf, axis=1, keepdims=True)          # (n, 1)
    diag = jnp.diagonal(adjf).reshape(1, n)                # (1, n)

    # padded, lane-dense operands (adjacency in bf16: exact for 0/1, half the HBM bytes of f32)
    yoh_p = jnp.zeros((npad, cp), f32).at[:n, :c].set(yoh)
    u_p = jnp.zeros((npad, cp), f32).at[:n, :c].set(U)
    e_p = jnp.zeros((npad, cp), f32).at[:n, :c].set(E)
    adj_p = jnp.zeros((npad, npad), jnp.bfloat16).at[:n, :n].set(adjf.astype(jnp.bfloat16))
    rs_p = jnp.zeros((npad, 1), f32).at[:n, :].set(rowsum)
    dg_p = jnp.zeros((1, npad), f32).at[:, :n].set(diag)

    na = npad // T
    nk = npad // TK
    grid = (na, na, nk)

    t_part, ssub_part, sint_part = pl.pallas_call(
        _eloss_kernel,
        out_shape=(
            jax.ShapeDtypeStruct((na, cp, cp), jnp.float32),   # exp-GAUC partials (per a-tile)
            jax.ShapeDtypeStruct((na, cp, cp), jnp.float32),   # S_sub partials
            jax.ShapeDtypeStruct((na, cp, cp), jnp.float32),   # S_int partials
        ),
        grid_spec=pltpu.PrefetchScalarGridSpec(
            num_scalar_prefetch=0,
            grid=grid,
            in_specs=[
                pl.BlockSpec((T, cp), lambda i, j, k: (i, 0)),    # yoh  (rows a)
                pl.BlockSpec((T, cp), lambda i, j, k: (i, 0)),    # U    (rows a)
                pl.BlockSpec((T, cp), lambda i, j, k: (j, 0)),    # yoh  (rows b)
                pl.BlockSpec((T, cp), lambda i, j, k: (j, 0)),    # E    (rows b)
                # a-row adjacency panel: with TK == npad its block index is constant over
                # the inner j loop, so Pallas keeps it resident (fetched once per a-tile).
                pl.BlockSpec((T, TK), lambda i, j, k: (i, k)),    # adj rows a, cols k
                pl.BlockSpec((T, TK), lambda i, j, k: (j, k)),    # adj rows b, cols k
                pl.BlockSpec((T, T), lambda i, j, k: (i, j)),     # adj block (a, b)
                pl.BlockSpec((T, 1), lambda i, j, k: (i, 0)),     # rowsum(A)[a]
                pl.BlockSpec((1, T), lambda i, j, k: (0, j)),     # diag(A)[b]
            ],
            out_specs=[
                pl.BlockSpec((1, cp, cp), lambda i, j, k: (i, 0, 0)),
                pl.BlockSpec((1, cp, cp), lambda i, j, k: (i, 0, 0)),
                pl.BlockSpec((1, cp, cp), lambda i, j, k: (i, 0, 0)),
            ],
            scratch_shapes=[pltpu.VMEM((T, T), jnp.float32)],     # CI accumulator
        ),
        compiler_params=pltpu.CompilerParams(
            dimension_semantics=("parallel", "arbitrary", "arbitrary"),
            vmem_limit_bytes=vmem_limit,
        ),
    )(yoh_p, u_p, yoh_p, e_p, adj_p, adj_p, adj_p, rs_p, dg_p)

    # ---- tiny O(C^2) combine + CE in the wrapper (keeps the a axis purely parallel) ----
    T_tot = jnp.sum(t_part, axis=0)
    S_sub = jnp.sum(ssub_part, axis=0)
    S_int = jnp.sum(sint_part, axis=0)

    # cross-entropy over the masked nodes (NaN for an empty mask, matching the torch module)
    lse = jax.scipy.special.logsumexp(predf, axis=-1)
    picked = jnp.take_along_axis(predf, labels.reshape(n, 1).astype(jnp.int32), axis=1)[:, 0]
    m1d = maskf[:, 0]
    ce = jnp.sum(m1d * (lse - picked)) / jnp.sum(m1d)

    Nv = jnp.zeros((cp,), f32).at[:c].set(jnp.sum(yoh, axis=0))
    denom = Nv[:, None] * Nv[None, :]
    idx = jnp.arange(cp)
    valid = (S_sub > 0.0) & (S_int > 0.0) & (idx[:, None] != idx[None, :]) & (denom > 0.0)
    pair = jnp.sum(jnp.where(valid, T_tot / jnp.where(denom > 0.0, denom, 1.0), 0.0))
    return ce + per * pair


def _numpy_reference(preds, labels, mask, adj, num_classes, gamma, per):
    """Faithful numpy port of the PyTorch forward (double loop over classes)."""
    preds = np.asarray(preds, dtype=np.float64)
    labels = np.asarray(labels)
    mask = np.asarray(mask).astype(bool)
    adj = np.asarray(adj).astype(bool)
    n = adj.shape[0]
    eye = np.eye(n, dtype=bool)
    hou = np.diag(np.diagonal(adj))
    adj_self = np.logical_xor(adj, hou) | eye

    pred = preds[mask]
    label = labels[mask]
    Y = np.eye(num_classes)[label]
    N = Y.sum(0)
    mx = pred.max(-1, keepdims=True)
    lse = mx[:, 0] + np.log(np.exp(pred - mx).sum(-1))
    loss = np.mean(lse - pred[np.arange(len(label)), label])

    adj_m = adj[mask]
    adj_self_m = adj_self[mask]
    s1 = 1.0 / (1.0 + np.exp(-1.0))
    for i in range(num_classes):
        for j in range(num_classes):
            if i == j:
                continue
            pos = Y[:, i].astype(bool)
            neg = Y[:, j].astype(bool)
            i_pred_pos = pred[pos, i]
            i_pred_neg = pred[neg, i]
            diff = i_pred_pos[:, None] - i_pred_neg[None, :]
            ij = np.exp(-gamma * diff)
            pos_adj = adj_m[pos]
            neg_adj = adj_m[neg]
            neg_self = adj_self_m[neg]
            sub = pos_adj[:, None, :] & (~neg_self[None, :, :])
            inter = pos_adj[:, None, :] & neg_adj[None, :, :]
            if sub.any() and inter.any():
                vi_sub = s1 * sub.sum(-1)
                vi_inter = s1 * inter.sum(-1)
                vl = 1.0 / (1.0 + np.exp(-((1.0 + vi_sub) / (1.0 + vi_inter))))
                v = 1.0 - vl
                loss += (ij * (1.0 / (N[i] * N[j])) * v).sum() * per
    return loss


if __name__ == "__main__":
    key = jax.random.PRNGKey(0)
    n_nodes, n_classes = 64, 4
    k1, k2, k3, k4 = jax.random.split(key, 4)
    preds = jax.random.normal(k1, (n_nodes, n_classes), dtype=jnp.float32)
    labels = jax.random.randint(k2, (n_nodes,), 0, n_classes, dtype=jnp.int32)
    mask = jax.random.bernoulli(k3, 0.75, (n_nodes,))
    adj_half = jax.random.bernoulli(k4, 0.15, (n_nodes, n_nodes))
    adj = jnp.logical_or(adj_half, adj_half.T)

    loss = eloss_forward(preds, labels, mask, adj, n_classes, gamma=1.0, per=0.8)
    loss = jax.block_until_ready(loss)

    ref = _numpy_reference(preds, labels, mask, adj, n_classes, gamma=1.0, per=0.8)
    np.testing.assert_allclose(float(loss), float(ref), rtol=1e-3, atol=1e-3)
    print("KERNEL_OK")
</pallas_src>

<mosaic_0001>
module attributes {stable_mosaic.version = 11 : i64} {
  func.func @_eloss_kernel(%arg0: i32, %arg1: i32, %arg2: i32, %arg3: memref<128x128xf32, #tpu.memory_space<vmem>>, %arg4: memref<128x128xf32, #tpu.memory_space<vmem>>, %arg5: memref<128x128xf32, #tpu.memory_space<vmem>>, %arg6: memref<128x128xf32, #tpu.memory_space<vmem>>, %arg7: memref<128x128xbf16, #tpu.memory_space<vmem>>, %arg8: memref<128x128xbf16, #tpu.memory_space<vmem>>, %arg9: memref<128x128xbf16, #tpu.memory_space<vmem>>, %arg10: memref<128x1xf32, #tpu.memory_space<vmem>>, %arg11: memref<1x128xf32, #tpu.memory_space<vmem>>, %arg12: memref<1x128x128xf32, #tpu.memory_space<vmem>>, %arg13: memref<1x128x128xf32, #tpu.memory_space<vmem>>, %arg14: memref<1x128x128xf32, #tpu.memory_space<vmem>>, %arg15: memref<128x128xf32, #tpu.memory_space<vmem>>) attributes {dimension_semantics = [#tpu.dimension_semantics<parallel>, #tpu.dimension_semantics<arbitrary>, #tpu.dimension_semantics<arbitrary>], iteration_bounds = array<i64: 1, 1, 1>, scalar_prefetch = 0 : i64, scratch_operands = 1 : i64, tpu.core_type = #tpu.core_type<tc>, window_params = [{transform_indices = @transform_0, window_bounds = array<i64: 128, 128>}, {transform_indices = @transform_1, window_bounds = array<i64: 128, 128>}, {transform_indices = @transform_2, window_bounds = array<i64: 128, 128>}, {transform_indices = @transform_3, window_bounds = array<i64: 128, 128>}, {transform_indices = @transform_4, window_bounds = array<i64: 128, 128>}, {transform_indices = @transform_5, window_bounds = array<i64: 128, 128>}, {transform_indices = @transform_6, window_bounds = array<i64: 128, 128>}, {transform_indices = @transform_7, window_bounds = array<i64: 128, 1>}, {transform_indices = @transform_8, window_bounds = array<i64: 1, 128>}, {transform_indices = @transform_9, window_bounds = array<i64: 1, 128, 128>}, {transform_indices = @transform_10, window_bounds = array<i64: 1, 128, 128>}, {transform_indices = @transform_11, window_bounds = array<i64: 1, 128, 128>}]} {
    %c0_i32 = arith.constant 0 : i32
    %0 = arith.cmpi eq, %arg1, %c0_i32 : i32
    %c0_i32_0 = arith.constant 0 : i32
    %1 = arith.cmpi eq, %arg2, %c0_i32_0 : i32
    %2 = arith.andi %0, %1 : i1
    %3 = arith.extui %2 : i1 to i32
    %c0_i32_1 = arith.constant 0 : i32
    %4 = arith.cmpi ne, %3, %c0_i32_1 : i32
    scf.if %4 {
      %cst_13 = arith.constant 0.000000e+00 : f32
      %17 = vector.broadcast %cst_13 : f32 to vector<1x128x128xf32>
      %c0_14 = arith.constant 0 : index
      %c0_15 = arith.constant 0 : index
      %c0_16 = arith.constant 0 : index
      %18 = vector.load %arg12[%c0_14, %c0_15, %c0_16] : memref<1x128x128xf32, #tpu.memory_space<vmem>>, vector<1x128x128xf32>
      tpu.vector_store %arg12[%c0_14, %c0_15, %c0_16], %17 {strides = array<i32>} : memref<1x128x128xf32, #tpu.memory_space<vmem>>, vector<1x128x128xf32>,
      %cst_17 = arith.constant 0.000000e+00 : f32
      %19 = vector.broadcast %cst_17 : f32 to vector<1x128x128xf32>
      %c0_18 = arith.constant 0 : index
      %c0_19 = arith.constant 0 : index
      %c0_20 = arith.constant 0 : index
      %20 = vector.load %arg13[%c0_18, %c0_19, %c0_20] : memref<1x128x128xf32, #tpu.memory_space<vmem>>, vector<1x128x128xf32>
      tpu.vector_store %arg13[%c0_18, %c0_19, %c0_20], %19 {strides = array<i32>} : memref<1x128x128xf32, #tpu.memory_space<vmem>>, vector<1x128x128xf32>,
      %cst_21 = arith.constant 0.000000e+00 : f32
      %21 = vector.broadcast %cst_21 : f32 to vector<1x128x128xf32>
      %c0_22 = arith.constant 0 : index
      %c0_23 = arith.constant 0 : index
      %c0_24 = arith.constant 0 : index
      %22 = vector.load %arg14[%c0_22, %c0_23, %c0_24] : memref<1x128x128xf32, #tpu.memory_space<vmem>>, vector<1x128x128xf32>
      tpu.vector_store %arg14[%c0_22, %c0_23, %c0_24], %21 {strides = array<i32>} : memref<1x128x128xf32, #tpu.memory_space<vmem>>, vector<1x128x128xf32>,
    } else {
    }
    %c0_i32_2 = arith.constant 0 : i32
    %5 = arith.cmpi eq, %arg2, %c0_i32_2 : i32
    %6 = arith.extui %5 : i1 to i32
    %c0_i32_3 = arith.constant 0 : i32
    %7 = arith.cmpi ne, %6, %c0_i32_3 : i32
    scf.if %7 {
      %cst_13 = arith.constant 0.000000e+00 : f32
      %17 = vector.broadcast %cst_13 : f32 to vector<128x128xf32>
      %c0_14 = arith.constant 0 : index
      %c0_15 = arith.constant 0 : index
      %18 = vector.load %arg15[%c0_14, %c0_15] : memref<128x128xf32, #tpu.memory_space<vmem>>, vector<128x128xf32>
      tpu.vector_store %arg15[%c0_14, %c0_15], %17 {strides = array<i32>} : memref<128x128xf32, #tpu.memory_space<vmem>>, vector<128x128xf32>,
    } else {
    }
    %c0 = arith.constant 0 : index
    %c0_4 = arith.constant 0 : index
    %8 = vector.load %arg15[%c0, %c0_4] : memref<128x128xf32, #tpu.memory_space<vmem>>, vector<128x128xf32>
    %c0_5 = arith.constant 0 : index
    %c0_6 = arith.constant 0 : index
    %9 = vector.load %arg7[%c0_5, %c0_6] : memref<128x128xbf16, #tpu.memory_space<vmem>>, vector<128x128xbf16>
    %c0_7 = arith.constant 0 : index
    %c0_8 = arith.constant 0 : index
    %10 = vector.load %arg8[%c0_7, %c0_8] : memref<128x128xbf16, #tpu.memory_space<vmem>>, vector<128x128xbf16>
    %cst = arith.constant dense<0.000000e+00> : vector<128x128xf32>
    %11 = tpu.matmul %9, %10, %cst {dimension_numbers = #tpu.dot_dimension_numbers<[1], [1], [0], [0], [0, 0, 1, 0], [], []>} : vector<128x128xbf16>, vector<128x128xbf16>, vector<128x128xf32> -> vector<128x128xf32>
    %12 = arith.addf %8, %11 : vector<128x128xf32>
    %c0_9 = arith.constant 0 : index
    %c0_10 = arith.constant 0 : index
    %13 = vector.load %arg15[%c0_9, %c0_10] : memref<128x128xf32, #tpu.memory_space<vmem>>, vector<128x128xf32>
    tpu.vector_store %arg15[%c0_9, %c0_10], %12 {strides = array<i32>} : memref<128x128xf32, #tpu.memory_space<vmem>>, vector<128x128xf32>,
    %c0_i32_11 = arith.constant 0 : i32
    %14 = arith.cmpi eq, %arg2, %c0_i32_11 : i32
    %15 = arith.extui %14 : i1 to i32
    %c0_i32_12 = arith.constant 0 : i32
    %16 = arith.cmpi ne, %15, %c0_i32_12 : i32
    scf.if %16 {
      %c0_13 = arith.constant 0 : index
      %c0_14 = arith.constant 0 : index
      %17 = vector.load %arg15[%c0_13, %c0_14] : memref<128x128xf32, #tpu.memory_space<vmem>>, vector<128x128xf32>
      %c0_15 = arith.constant 0 : index
      %c0_16 = arith.constant 0 : index
      %18 = vector.load %arg9[%c0_15, %c0_16] : memref<128x128xbf16, #tpu.memory_space<vmem>>, vector<128x128xbf16>
      %19 = arith.extf %18 : vector<128x128xbf16> to vector<128x128xf32>
      %c0_17 = arith.constant 0 : index
      %c0_18 = arith.constant 0 : index
      %20 = vector.load %arg10[%c0_17, %c0_18] : memref<128x1xf32, #tpu.memory_space<vmem>>, vector<128x1xf32>
      %21 = vector.broadcast %20 : vector<128x1xf32> to vector<128x128xf32>
      %22 = arith.subf %21, %17 : vector<128x128xf32>
      %c0_19 = arith.constant 0 : index
      %c0_20 = arith.constant 0 : index
      %23 = vector.load %arg11[%c0_19, %c0_20] : memref<1x128xf32, #tpu.memory_space<vmem>>, vector<1x128xf32>
      %cst_21 = arith.constant 1.000000e+00 : f32
      %24 = vector.broadcast %cst_21 : f32 to vector<1x128xf32>
      %25 = arith.subf %24, %23 : vector<1x128xf32>
      %26 = vector.broadcast %25 : vector<1x128xf32> to vector<128x128xf32>
      %27 = arith.mulf %19, %26 : vector<128x128xf32>
      %28 = arith.subf %22, %27 : vector<128x128xf32>
      %c0_22 = arith.constant 0 : index
      %c0_23 = arith.constant 0 : index
      %29 = vector.load %arg3[%c0_22, %c0_23] : memref<128x128xf32, #tpu.memory_space<vmem>>, vector<128x128xf32>
      %c0_24 = arith.constant 0 : index
      %c0_25 = arith.constant 0 : index
      %30 = vector.load %arg5[%c0_24, %c0_25] : memref<128x128xf32, #tpu.memory_space<vmem>>, vector<128x128xf32>
      %cst_26 = arith.constant 0.000000e+00 : f32
      %31 = vector.broadcast %cst_26 : f32 to vector<128x128xf32>
      %32 = arith.cmpf ogt, %28, %31 : vector<128x128xf32>
      %33 = arith.extui %32 : vector<128x128xi1> to vector<128x128xi32>
      %34 = arith.sitofp %33 : vector<128x128xi32> to vector<128x128xf32>
      %35 = arith.truncf %34 : vector<128x128xf32> to vector<128x128xbf16>
      %cst_27 = arith.constant 0.000000e+00 : f32
      %36 = vector.broadcast %cst_27 : f32 to vector<128x128xf32>
      %37 = arith.cmpf ogt, %17, %36 : vector<128x128xf32>
      %38 = arith.extui %37 : vector<128x128xi1> to vector<128x128xi32>
      %39 = arith.sitofp %38 : vector<128x128xi32> to vector<128x128xf32>
      %40 = arith.truncf %39 : vector<128x128xf32> to vector<128x128xbf16>
      %41 = tpu.concatenate %35, %40 in 0 : vector<128x128xbf16>, vector<128x128xbf16> -> vector<256x128xbf16>
      %42 = arith.truncf %30 : vector<128x128xf32> to vector<128x128xbf16>
      %cst_28 = arith.constant dense<0.000000e+00> : vector<256x128xf32>
      %43 = tpu.matmul %41, %42, %cst_28 {dimension_numbers = #tpu.dot_dimension_numbers<[1], [0], [0], [1], [0, 0, 1, 1], [], []>} : vector<256x128xbf16>, vector<128x128xbf16>, vector<256x128xf32> -> vector<256x128xf32>
      %44 = vector.extract_strided_slice %43 {offsets = [0, 0], sizes = [128, 128], strides = [1, 1]} : vector<256x128xf32> to vector<128x128xf32>
      %45 = vector.extract_strided_slice %43 {offsets = [128, 0], sizes = [128, 128], strides = [1, 1]} : vector<256x128xf32> to vector<128x128xf32>
      %46 = tpu.concatenate %44, %45 in 1 : vector<128x128xf32>, vector<128x128xf32> -> vector<128x256xf32>
      %47 = arith.truncf %29 : vector<128x128xf32> to vector<128x128xbf16>
      %48 = arith.truncf %46 : vector<128x256xf32> to vector<128x256xbf16>
      %cst_29 = arith.constant dense<0.000000e+00> : vector<128x256xf32>
      %49 = tpu.matmul %47, %48, %cst_29 {dimension_numbers = #tpu.dot_dimension_numbers<[0], [0], [1], [1], [0, 1, 1, 1], [], []>} : vector<128x128xbf16>, vector<128x256xbf16>, vector<128x256xf32> -> vector<128x256xf32>
      %c0_30 = arith.constant 0 : index
      %c0_31 = arith.constant 0 : index
      %c0_32 = arith.constant 0 : index
      %50 = vector.load %arg13[%c0_30, %c0_31, %c0_32] : memref<1x128x128xf32, #tpu.memory_space<vmem>>, vector<1x128x128xf32>
      %51 = vector.extract_strided_slice %49 {offsets = [0, 0], sizes = [128, 128], strides = [1, 1]} : vector<128x256xf32> to vector<128x128xf32>
      %52 = vector.shape_cast %51 : vector<128x128xf32> to vector<1x128x128xf32>
      %53 = arith.addf %50, %52 : vector<1x128x128xf32>
      %c0_33 = arith.constant 0 : index
      %c0_34 = arith.constant 0 : index
      %c0_35 = arith.constant 0 : index
      %54 = vector.load %arg13[%c0_33, %c0_34, %c0_35] : memref<1x128x128xf32, #tpu.memory_space<vmem>>, vector<1x128x128xf32>
      tpu.vector_store %arg13[%c0_33, %c0_34, %c0_35], %53 {strides = array<i32>} : memref<1x128x128xf32, #tpu.memory_space<vmem>>, vector<1x128x128xf32>,
      %c0_36 = arith.constant 0 : index
      %c0_37 = arith.constant 0 : index
      %c0_38 = arith.constant 0 : index
      %55 = vector.load %arg14[%c0_36, %c0_37, %c0_38] : memref<1x128x128xf32, #tpu.memory_space<vmem>>, vector<1x128x128xf32>
      %56 = vector.extract_strided_slice %49 {offsets = [0, 128], sizes = [128, 128], strides = [1, 1]} : vector<128x256xf32> to vector<128x128xf32>
      %57 = vector.shape_cast %56 : vector<128x128xf32> to vector<1x128x128xf32>
      %58 = arith.addf %55, %57 : vector<1x128x128xf32>
      %c0_39 = arith.constant 0 : index
      %c0_40 = arith.constant 0 : index
      %c0_41 = arith.constant 0 : index
      %59 = vector.load %arg14[%c0_39, %c0_40, %c0_41] : memref<1x128x128xf32, #tpu.memory_space<vmem>>, vector<1x128x128xf32>
      tpu.vector_store %arg14[%c0_39, %c0_40, %c0_41], %58 {strides = array<i32>} : memref<1x128x128xf32, #tpu.memory_space<vmem>>, vector<1x128x128xf32>,
      %cst_42 = arith.constant 0.731058597 : f32
      %60 = vector.broadcast %cst_42 : f32 to vector<128x128xf32>
      %61 = arith.mulf %60, %17 : vector<128x128xf32>
      %cst_43 = arith.constant 1.000000e+00 : f32
      %62 = vector.broadcast %cst_43 : f32 to vector<128x128xf32>
      %63 = arith.addf %62, %61 : vector<128x128xf32>
      %64 = tpu.reciprocal %63 {approx = true} : vector<128x128xf32> -> vector<128x128xf32>
      %cst_44 = arith.constant 0.731058597 : f32
      %65 = vector.broadcast %cst_44 : f32 to vector<128x128xf32>
      %66 = arith.mulf %65, %28 : vector<128x128xf32>
      %cst_45 = arith.constant 1.000000e+00 : f32
      %67 = vector.broadcast %cst_45 : f32 to vector<128x128xf32>
      %68 = arith.addf %67, %66 : vector<128x128xf32>
      %cst_46 = arith.constant 0.000000e+00 : f32
      %69 = vector.broadcast %cst_46 : f32 to vector<128x128xf32>
      %70 = arith.subf %69, %68 : vector<128x128xf32>
      %71 = arith.mulf %70, %64 : vector<128x128xf32>
      %72 = arith.negf %71 : vector<128x128xf32>
      %73 = math.exp %72 : vector<128x128xf32>
      %cst_47 = arith.constant 1.000000e+00 : f32
      %74 = vector.broadcast %cst_47 : f32 to vector<128x128xf32>
      %75 = arith.addf %74, %73 : vector<128x128xf32>
      %76 = arith.divf %74, %75 : vector<128x128xf32>
      %c0_48 = arith.constant 0 : index
      %c0_49 = arith.constant 0 : index
      %77 = vector.load %arg4[%c0_48, %c0_49] : memref<128x128xf32, #tpu.memory_space<vmem>>, vector<128x128xf32>
      %cst_50 = arith.constant dense<0.000000e+00> : vector<128x128xf32>
      %78 = tpu.matmul %76, %77, %cst_50 {dimension_numbers = #tpu.dot_dimension_numbers<[0], [0], [1], [1], [0, 1, 1, 1], [], []>} : vector<128x128xf32>, vector<128x128xf32>, vector<128x128xf32> -> vector<128x128xf32>
      %c0_51 = arith.constant 0 : index
      %c0_52 = arith.constant 0 : index
      %79 = vector.load %arg6[%c0_51, %c0_52] : memref<128x128xf32, #tpu.memory_space<vmem>>, vector<128x128xf32>
      %80 = arith.mulf %78, %79 : vector<128x128xf32>
      %c0_53 = arith.constant 0 : index
      %c0_54 = arith.constant 0 : index
      %c0_55 = arith.constant 0 : index
      %81 = vector.load %arg12[%c0_53, %c0_54, %c0_55] : memref<1x128x128xf32, #tpu.memory_space<vmem>>, vector<1x128x128xf32>
      %cst_56 = arith.constant dense<0.000000e+00> : vector<128x128xf32>
      %82 = tpu.matmul %80, %30, %cst_56 {dimension_numbers = #tpu.dot_dimension_numbers<[0], [0], [1], [1], [0, 1, 1, 1], [], []>} : vector<128x128xf32>, vector<128x128xf32>, vector<128x128xf32> -> vector<128x128xf32>
      %83 = vector.shape_cast %82 : vector<128x128xf32> to vector<1x128x128xf32>
      %84 = arith.addf %81, %83 : vector<1x128x128xf32>
      %c0_57 = arith.constant 0 : index
      %c0_58 = arith.constant 0 : index
      %c0_59 = arith.constant 0 : index
      %85 = vector.load %arg12[%c0_57, %c0_58, %c0_59] : memref<1x128x128xf32, #tpu.memory_space<vmem>>, vector<1x128x128xf32>
      tpu.vector_store %arg12[%c0_57, %c0_58, %c0_59], %84 {strides = array<i32>} : memref<1x128x128xf32, #tpu.memory_space<vmem>>, vector<1x128x128xf32>,
    } else {
    }
    return
  }
  func.func @transform_0(%arg0: i32, %arg1: i32, %arg2: i32) -> (i32, i32) {
    %c0_i32 = arith.constant 0 : i32
    %c0_i32_0 = arith.constant 0 : i32
    return %arg0, %c0_i32 : i32, i32
  }
  func.func @transform_1(%arg0: i32, %arg1: i32, %arg2: i32) -> (i32, i32) {
    %c0_i32 = arith.constant 0 : i32
    %c0_i32_0 = arith.constant 0 : i32
    return %arg0, %c0_i32 : i32, i32
  }
  func.func @transform_2(%arg0: i32, %arg1: i32, %arg2: i32) -> (i32, i32) {
    %c0_i32 = arith.constant 0 : i32
    %c0_i32_0 = arith.constant 0 : i32
    return %arg1, %c0_i32 : i32, i32
  }
  func.func @transform_3(%arg0: i32, %arg1: i32, %arg2: i32) -> (i32, i32) {
    %c0_i32 = arith.constant 0 : i32
    %c0_i32_0 = arith.constant 0 : i32
    return %arg1, %c0_i32 : i32, i32
  }
  func.func @transform_4(%arg0: i32, %arg1: i32, %arg2: i32) -> (i32, i32) {
    %c0_i32 = arith.constant 0 : i32
    return %arg0, %arg2 : i32, i32
  }
  func.func @transform_5(%arg0: i32, %arg1: i32, %arg2: i32) -> (i32, i32) {
    %c0_i32 = arith.constant 0 : i32
    return %arg1, %arg2 : i32, i32
  }
  func.func @transform_6(%arg0: i32, %arg1: i32, %arg2: i32) -> (i32, i32) {
    %c0_i32 = arith.constant 0 : i32
    return %arg0, %arg1 : i32, i32
  }
  func.func @transform_7(%arg0: i32, %arg1: i32, %arg2: i32) -> (i32, i32) {
    %c0_i32 = arith.constant 0 : i32
    %c0_i32_0 = arith.constant 0 : i32
    return %arg0, %c0_i32 : i32, i32
  }
  func.func @transform_8(%arg0: i32, %arg1: i32, %arg2: i32) -> (i32, i32) {
    %c0_i32 = arith.constant 0 : i32
    %c0_i32_0 = arith.constant 0 : i32
    return %c0_i32, %arg1 : i32, i32
  }
  func.func @transform_9(%arg0: i32, %arg1: i32, %arg2: i32) -> (i32, i32, i32) {
    %c0_i32 = arith.constant 0 : i32
    %c0_i32_0 = arith.constant 0 : i32
    %c0_i32_1 = arith.constant 0 : i32
    return %arg0, %c0_i32, %c0_i32_0 : i32, i32, i32
  }
  func.func @transform_10(%arg0: i32, %arg1: i32, %arg2: i32) -> (i32, i32, i32) {
    %c0_i32 = arith.constant 0 : i32
    %c0_i32_0 = arith.constant 0 : i32
    %c0_i32_1 = arith.constant 0 : i32
    return %arg0, %c0_i32, %c0_i32_0 : i32, i32, i32
  }
  func.func @transform_11(%arg0: i32, %arg1: i32, %arg2: i32) -> (i32, i32, i32) {
    %c0_i32 = arith.constant 0 : i32
    %c0_i32_0 = arith.constant 0 : i32
    %c0_i32_1 = arith.constant 0 : i32
    return %arg0, %c0_i32, %c0_i32_0 : i32, i32, i32
  }
}

</mosaic_0001>

<llo_original>
// kernel: tpu_custom_call.1
$region0: #{tpu_custom_call.1}
  #allocation0 [shape = 'u32[]', space=smem, size = 0x4, offset = 0x4, fixed_abs, tag = 'smem constant byte address 0x4 - core index']
  #allocation1 [shape = 'u32[72,128]{1,0:T(1,128)}', space=vmem, size = 0x9000, scoped, tag = 'internal scratch']
  #allocation2 [shape = 'f32[128,128]{1,0:T(8,128)}', space=vmem, size = 0x10000, scoped, tag = 'scratch operand']
  %s0 = inlined_call_operand.vmem [shape: f32[128,128], index: 0, kind: input, shape index: {}]
  %s1 = inlined_call_operand.hbm [shape: f32[128,128], index: 1, kind: input, shape index: {}]
  %s2 = inlined_call_operand.hbm [shape: f32[128,128], index: 2, kind: input, shape index: {}]
  %s3 = inlined_call_operand.hbm [shape: f32[128,128], index: 3, kind: input, shape index: {}]
  %s4 = inlined_call_operand.hbm [shape: bf16[128,128], index: 4, kind: input, shape index: {}]
  %s5 = inlined_call_operand.hbm [shape: bf16[128,128], index: 5, kind: input, shape index: {}]
  %s6 = inlined_call_operand.hbm [shape: bf16[128,128], index: 6, kind: input, shape index: {}]
  %s7 = inlined_call_operand.vmem [shape: f32[128,1], index: 7, kind: input, shape index: {}]
  %s8 = inlined_call_operand.vmem [shape: f32[1,128], index: 8, kind: input, shape index: {}]
  %s9 = inlined_call_operand.hbm [shape: f32[1,128,128], index: 9, kind: output, shape index: {0}]
  %s10 = inlined_call_operand.hbm [shape: f32[1,128,128], index: 10, kind: output, shape index: {1}]
  %s11 = inlined_call_operand.hbm [shape: f32[1,128,128], index: 11, kind: output, shape index: {2}]
  %12 = xla_tuple %s9, %s10, %s11
  %s13 = sld [smem:[#allocation0]]
  $region98: #{tpu_custom_call.1} parent=0
    _
  %s15 = ssub.s32 1, %s13
  %s16 = scalar_select 0, %s15, %s13
  $region1: #{tpu_custom_call.1} parent=0
    #allocation3 [shape = 'u8[65536]{0}', space=vmem, size = 0x10000, scoped, tag = 'input window, operand 1, single buffered']
    #allocation4 [shape = 's32[1]{0}', space=sflag, size = 0x4, scoped, tag = 'scoped memory for tpu_custom_call.1']
    #allocation5 [shape = 's32[1]{0}', space=sflag, size = 0x4, scoped, tag = 'scoped memory for tpu_custom_call.1']
    #allocation6 [shape = 'u8[65536]{0}', space=vmem, size = 0x10000, scoped, tag = 'input window, operand 2, single buffered']
    #allocation7 [shape = 's32[1]{0}', space=sflag, size = 0x4, scoped, tag = 'scoped memory for tpu_custom_call.1']
    #allocation8 [shape = 'u8[65536]{0}', space=vmem, size = 0x10000, scoped, tag = 'input window, operand 3, single buffered']
    #allocation9 [shape = 'u8[32768]{0}', space=vmem, size = 0x8000, scoped, tag = 'input window, operand 4, single buffered']
    #allocation10 [shape = 's32[1]{0}', space=sflag, size = 0x4, scoped, tag = 'scoped memory for tpu_custom_call.1']
    #allocation11 [shape = 'u8[32768]{0}', space=vmem, size = 0x8000, scoped, tag = 'input window, operand 5, single buffered']
    #allocation12 [shape = 'u8[32768]{0}', space=vmem, size = 0x8000, scoped, tag = 'input window, operand 6, single buffered']
    #allocation13 [shape = 's32[1]{0}', space=sflag, size = 0x4, scoped, tag = 'scoped memory for tpu_custom_call.1']
    #allocation14 [shape = 'u8[65536]{0}', space=vmem, size = 0x10000, scoped, tag = 'output window, operand 0, single buffered']
    #allocation15 [shape = 'u8[65536]{0}', space=vmem, size = 0x10000, scoped, tag = 'output window, operand 1, single buffered']
    #allocation16 [shape = 's32[1]{0}', space=sflag, size = 0x4, scoped, tag = 'scoped memory for tpu_custom_call.1']
    #allocation17 [shape = 'u8[65536]{0}', space=vmem, size = 0x10000, scoped, tag = 'output window, operand 2, single buffered']
    %17 = vsyncpa [#allocation4], 0
    %18 = vsyncpa [#allocation7], 0
    %19 = vsyncpa [#allocation10], 0
    %20 = vsyncpa [#allocation13], 0
    %21 = vsyncpa [#allocation5], 0
    %22 = vsyncpa [#allocation16], 0
    // Predicated region
    $region2: #{tpu_custom_call.1} parent=1 // pred_check
      _
    $region3: #{tpu_custom_call.1} parent=1 // pred_check_branch
      %24 = sbr.rel (0) target = $region5
    $region4: #{tpu_custom_call.1} parent=1 // pred_region
      _
    $region5: #{tpu_custom_call.1} parent=1 // pred_fallthru
      _
    // Predicated region
    $region6: #{tpu_custom_call.1} parent=1 // pred_check
      _
    $region7: #{tpu_custom_call.1} parent=1 // pred_check_branch
      %26 = sbr.rel (0) target = $region9
    $region8: #{tpu_custom_call.1} parent=1 // pred_region
      %28 = vsyncadd [#allocation4], 0
      %s29 = sshll.u32 %s1, 4
      %s30 = int_to_ptr.hbm [resolvable:$true] %s29
      %s31 = sshll.u32 [#allocation3], 4
      %s32 = int_to_ptr.vmem [resolvable:$true] %s31
      %37 = dma.hbm_to_vmem [thread:$0]  %s30, 2048, %s32, [#allocation4], 128, 128, 8
    $region9: #{tpu_custom_call.1} parent=1 // pred_fallthru
      _
    // Predicated region
    $region10: #{tpu_custom_call.1} parent=1 // pred_check
      _
    $region11: #{tpu_custom_call.1} parent=1 // pred_check_branch
      %39 = sbr.rel (0) target = $region13
    $region12: #{tpu_custom_call.1} parent=1 // pred_region
      %41 = vsyncadd [#allocation7], 0
      %s42 = sshll.u32 %s2, 4
      %s43 = int_to_ptr.hbm [resolvable:$true] %s42
      %s44 = sshll.u32 [#allocation6], 4
      %s45 = int_to_ptr.vmem [resolvable:$true] %s44
      %50 = dma.hbm_to_vmem [thread:$0]  %s43, 2048, %s45, [#allocation7], 128, 128, 8
    $region13: #{tpu_custom_call.1} parent=1 // pred_fallthru
      _
    // Predicated region
    $region14: #{tpu_custom_call.1} parent=1 // pred_check
      _
    $region15: #{tpu_custom_call.1} parent=1 // pred_check_branch
      %52 = sbr.rel (0) target = $region17
    $region16: #{tpu_custom_call.1} parent=1 // pred_region
      %54 = vsyncadd [#allocation7], 0
      %s55 = sshll.u32 %s3, 4
      %s56 = int_to_ptr.hbm [resolvable:$true] %s55
      %s57 = sshll.u32 [#allocation8], 4
      %s58 = int_to_ptr.vmem [resolvable:$true] %s57
      %63 = dma.hbm_to_vmem [thread:$0]  %s56, 2048, %s58, [#allocation7], 128, 128, 8
    $region17: #{tpu_custom_call.1} parent=1 // pred_fallthru
      _
    // Predicated region
    $region18: #{tpu_custom_call.1} parent=1 // pred_check
      _
    $region19: #{tpu_custom_call.1} parent=1 // pred_check_branch
      %65 = sbr.rel (0) target = $region21
    $region20: #{tpu_custom_call.1} parent=1 // pred_region
      %67 = vsyncadd [#allocation10], 0
      %s68 = sshll.u32 %s4, 4
      %s69 = int_to_ptr.hbm [resolvable:$true] %s68
      %s70 = sshll.u32 [#allocation9], 4
      %s71 = int_to_ptr.vmem [resolvable:$true] %s70
      %76 = dma.hbm_to_vmem [thread:$0]  %s69, 1024, %s71, [#allocation10], 64, 64, 4
    $region21: #{tpu_custom_call.1} parent=1 // pred_fallthru
      _
    // Predicated region
    $region22: #{tpu_custom_call.1} parent=1 // pred_check
      _
    $region23: #{tpu_custom_call.1} parent=1 // pred_check_branch
      %78 = sbr.rel (0) target = $region25
    $region24: #{tpu_custom_call.1} parent=1 // pred_region
      %80 = vsyncadd [#allocation10], 0
      %s81 = sshll.u32 %s5, 4
      %s82 = int_to_ptr.hbm [resolvable:$true] %s81
      %s83 = sshll.u32 [#allocation11], 4
      %s84 = int_to_ptr.vmem [resolvable:$true] %s83
      %89 = dma.hbm_to_vmem [thread:$0]  %s82, 1024, %s84, [#allocation10], 64, 64, 4
    $region25: #{tpu_custom_call.1} parent=1 // pred_fallthru
      _
    // Predicated region
    $region26: #{tpu_custom_call.1} parent=1 // pred_check
      _
    $region27: #{tpu_custom_call.1} parent=1 // pred_check_branch
      %91 = sbr.rel (0) target = $region29
    $region28: #{tpu_custom_call.1} parent=1 // pred_region
      %93 = vsyncadd [#allocation13], 0
      %s94 = sshll.u32 %s6, 4
      %s95 = int_to_ptr.hbm [resolvable:$true] %s94
      %s96 = sshll.u32 [#allocation12], 4
      %s97 = int_to_ptr.vmem [resolvable:$true] %s96
      %102 = dma.hbm_to_vmem [thread:$0]  %s95, 1024, %s97, [#allocation13], 64, 64, 4
    $region29: #{tpu_custom_call.1} parent=1 // pred_fallthru
      _
    // Predicated region
    $region30: #{tpu_custom_call.1} parent=1 // pred_check
      _
    $region31: #{tpu_custom_call.1} parent=1 // pred_check_branch
      %104 = sbr.rel (0) target = $region33
    $region32: #{tpu_custom_call.1} parent=1 // pred_region
      _
    $region33: #{tpu_custom_call.1} parent=1 // pred_fallthru
      _
    // Predicated region
    $region34: #{tpu_custom_call.1} parent=1 // pred_check
      _
    $region35: #{tpu_custom_call.1} parent=1 // pred_check_branch
      %106 = sbr.rel (0) target = $region37
    $region36: #{tpu_custom_call.1} parent=1 // pred_region
      _
    $region37: #{tpu_custom_call.1} parent=1 // pred_fallthru
      _
    // Predicated region
    $region38: #{tpu_custom_call.1} parent=1 // pred_check
      _
    $region39: #{tpu_custom_call.1} parent=1 // pred_check_branch
      %108 = sbr.rel (0) target = $region41
    $region40: #{tpu_custom_call.1} parent=1 // pred_region
      %110 = dma.done [#allocation4], 2048
    $region41: #{tpu_custom_call.1} parent=1 // pred_fallthru
      _
    // Predicated region
    $region42: #{tpu_custom_call.1} parent=1 // pred_check
      _
    $region43: #{tpu_custom_call.1} parent=1 // pred_check_branch
      %112 = sbr.rel (0) target = $region45
    $region44: #{tpu_custom_call.1} parent=1 // pred_region
      %114 = dma.done [#allocation7], 2048
    $region45: #{tpu_custom_call.1} parent=1 // pred_fallthru
      _
    // Predicated region
    $region46: #{tpu_custom_call.1} parent=1 // pred_check
      _
    $region47: #{tpu_custom_call.1} parent=1 // pred_check_branch
      %116 = sbr.rel (0) target = $region49
    $region48: #{tpu_custom_call.1} parent=1 // pred_region
      %118 = dma.done [#allocation7], 2048
    $region49: #{tpu_custom_call.1} parent=1 // pred_fallthru
      _
    // Predicated region
    $region50: #{tpu_custom_call.1} parent=1 // pred_check
      _
    $region51: #{tpu_custom_call.1} parent=1 // pred_check_branch
      %120 = sbr.rel (0) target = $region53
    $region52: #{tpu_custom_call.1} parent=1 // pred_region
      %122 = dma.done [#allocation10], 1024
    $region53: #{tpu_custom_call.1} parent=1 // pred_fallthru
      _
    // Predicated region
    $region54: #{tpu_custom_call.1} parent=1 // pred_check
      _
    $region55: #{tpu_custom_call.1} parent=1 // pred_check_branch
      %124 = sbr.rel (0) target = $region57
    $region56: #{tpu_custom_call.1} parent=1 // pred_region
      %126 = dma.done [#allocation10], 1024
    $region57: #{tpu_custom_call.1} parent=1 // pred_fallthru
      _
    // Predicated region
    $region58: #{tpu_custom_call.1} parent=1 // pred_check
      _
    $region59: #{tpu_custom_call.1} parent=1 // pred_check_branch
      %128 = sbr.rel (0) target = $region61
    $region60: #{tpu_custom_call.1} parent=1 // pred_region
      %130 = dma.done [#allocation13], 1024
    $region61: #{tpu_custom_call.1} parent=1 // pred_fallthru
      _
    %p131 = scmp.eq.s32.totalorder 0, 0
    %p132 = scmp.eq.s32.totalorder 0, 0
    %p133 = pnand %p131, %p132
    %p134 = pneg %p133
    // Predicated region
    $region62: #{tpu_custom_call.1} parent=1 // pred_check
      _
    $region63: #{tpu_custom_call.1} parent=1 // pred_check_branch
      %136 = sbr.rel (%p133) target = $region65
    $region64: #{tpu_custom_call.1} parent=1 // pred_region
      %137 = vst [vmem:[#allocation14] sm:$0xff] 0.0
      %138 = vst [vmem:[#allocation14 + $0x8] sm:$0xff] 0.0
      %139 = vst [vmem:[#allocation14 + $0x10] sm:$0xff] 0.0
      %140 = vst [vmem:[#allocation14 + $0x18] sm:$0xff] 0.0
      %141 = vst [vmem:[#allocation14 + $0x20] sm:$0xff] 0.0
      %142 = vst [vmem:[#allocation14 + $0x28] sm:$0xff] 0.0
      %143 = vst [vmem:[#allocation14 + $0x30] sm:$0xff] 0.0
      %144 = vst [vmem:[#allocation14 + $0x38] sm:$0xff] 0.0
      %145 = vst [vmem:[#allocation14 + $0x40] sm:$0xff] 0.0
      %146 = vst [vmem:[#allocation14 + $0x48] sm:$0xff] 0.0
      %147 = vst [vmem:[#allocation14 + $0x50] sm:$0xff] 0.0
      %148 = vst [vmem:[#allocation14 + $0x58] sm:$0xff] 0.0
      %149 = vst [vmem:[#allocation14 + $0x60] sm:$0xff] 0.0
      %150 = vst [vmem:[#allocation14 + $0x68] sm:$0xff] 0.0
      %151 = vst [vmem:[#allocation14 + $0x70] sm:$0xff] 0.0
      %152 = vst [vmem:[#allocation14 + $0x78] sm:$0xff] 0.0
      %153 = vst [vmem:[#allocation15] sm:$0xff] 0.0
      %154 = vst [vmem:[#allocation15 + $0x8] sm:$0xff] 0.0
      %155 = vst [vmem:[#allocation15 + $0x10] sm:$0xff] 0.0
      %156 = vst [vmem:[#allocation15 + $0x18] sm:$0xff] 0.0
      %157 = vst [vmem:[#allocation15 + $0x20] sm:$0xff] 0.0
      %158 = vst [vmem:[#allocation15 + $0x28] sm:$0xff] 0.0
      %159 = vst [vmem:[#allocation15 + $0x30] sm:$0xff] 0.0
      %160 = vst [vmem:[#allocation15 + $0x38] sm:$0xff] 0.0
      %161 = vst [vmem:[#allocation15 + $0x40] sm:$0xff] 0.0
      %162 = vst [vmem:[#allocation15 + $0x48] sm:$0xff] 0.0
      %163 = vst [vmem:[#allocation15 + $0x50] sm:$0xff] 0.0
      %164 = vst [vmem:[#allocation15 + $0x58] sm:$0xff] 0.0
      %165 = vst [vmem:[#allocation15 + $0x60] sm:$0xff] 0.0
      %166 = vst [vmem:[#allocation15 + $0x68] sm:$0xff] 0.0
      %167 = vst [vmem:[#allocation15 + $0x70] sm:$0xff] 0.0
      %168 = vst [vmem:[#allocation15 + $0x78] sm:$0xff] 0.0
      %169 = vst [vmem:[#allocation17] sm:$0xff] 0.0
      %170 = vst [vmem:[#allocation17 + $0x8] sm:$0xff] 0.0
      %171 = vst [vmem:[#allocation17 + $0x10] sm:$0xff] 0.0
      %172 = vst [vmem:[#allocation17 + $0x18] sm:$0xff] 0.0
      %173 = vst [vmem:[#allocation17 + $0x20] sm:$0xff] 0.0
      %174 = vst [vmem:[#allocation17 + $0x28] sm:$0xff] 0.0
      %175 = vst [vmem:[#allocation17 + $0x30] sm:$0xff] 0.0
      %176 = vst [vmem:[#allocation17 + $0x38] sm:$0xff] 0.0
      %177 = vst [vmem:[#allocation17 + $0x40] sm:$0xff] 0.0
      %178 = vst [vmem:[#allocation17 + $0x48] sm:$0xff] 0.0
      %179 = vst [vmem:[#allocation17 + $0x50] sm:$0xff] 0.0
      %180 = vst [vmem:[#allocation17 + $0x58] sm:$0xff] 0.0
      %181 = vst [vmem:[#allocation17 + $0x60] sm:$0xff] 0.0
      %182 = vst [vmem:[#allocation17 + $0x68] sm:$0xff] 0.0
      %183 = vst [vmem:[#allocation17 + $0x70] sm:$0xff] 0.0
      %184 = vst [vmem:[#allocation17 + $0x78] sm:$0xff] 0.0
    $region65: #{tpu_custom_call.1} parent=1 // pred_fallthru
      _
    // Predicated region
    $region66: #{tpu_custom_call.1} parent=1 // pred_check
      %p185 = pneg %p132
    $region67: #{tpu_custom_call.1} parent=1 // pred_check_branch
      %187 = sbr.rel (%p185) target = $region69
    $region68: #{tpu_custom_call.1} parent=1 // pred_region
      %188 = vst [vmem:[#allocation2] sm:$0xff] 0.0
      %189 = vst [vmem:[#allocation2 + $0x8] sm:$0xff] 0.0
      %190 = vst [vmem:[#allocation2 + $0x10] sm:$0xff] 0.0
      %191 = vst [vmem:[#allocation2 + $0x18] sm:$0xff] 0.0
      %192 = vst [vmem:[#allocation2 + $0x20] sm:$0xff] 0.0
      %193 = vst [vmem:[#allocation2 + $0x28] sm:$0xff] 0.0
      %194 = vst [vmem:[#allocation2 + $0x30] sm:$0xff] 0.0
      %195 = vst [vmem:[#allocation2 + $0x38] sm:$0xff] 0.0
      %196 = vst [vmem:[#allocation2 + $0x40] sm:$0xff] 0.0
      %197 = vst [vmem:[#allocation2 + $0x48] sm:$0xff] 0.0
      %198 = vst [vmem:[#allocation2 + $0x50] sm:$0xff] 0.0
      %199 = vst [vmem:[#allocation2 + $0x58] sm:$0xff] 0.0
      %200 = vst [vmem:[#allocation2 + $0x60] sm:$0xff] 0.0
      %201 = vst [vmem:[#allocation2 + $0x68] sm:$0xff] 0.0
      %202 = vst [vmem:[#allocation2 + $0x70] sm:$0xff] 0.0
      %203 = vst [vmem:[#allocation2 + $0x78] sm:$0xff] 0.0
    $region69: #{tpu_custom_call.1} parent=1 // pred_fallthru
      _
    %v204 = vld [vmem:[#allocation2] sm:$0xff]
    %v205 = vld [vmem:[#allocation2 + $0x8] sm:$0xff]
    %v206 = vld [vmem:[#allocation2 + $0x10] sm:$0xff]
    %v207 = vld [vmem:[#allocation2 + $0x18] sm:$0xff]
    %v208 = vld [vmem:[#allocation2 + $0x20] sm:$0xff]
    %v209 = vld [vmem:[#allocation2 + $0x28] sm:$0xff]
    %v210 = vld [vmem:[#allocation2 + $0x30] sm:$0xff]
    %v211 = vld [vmem:[#allocation2 + $0x38] sm:$0xff]
    %v212 = vld [vmem:[#allocation2 + $0x40] sm:$0xff]
    %v213 = vld [vmem:[#allocation2 + $0x48] sm:$0xff]
    %v214 = vld [vmem:[#allocation2 + $0x50] sm:$0xff]
    %v215 = vld [vmem:[#allocation2 + $0x58] sm:$0xff]
    %v216 = vld [vmem:[#allocation2 + $0x60] sm:$0xff]
    %v217 = vld [vmem:[#allocation2 + $0x68] sm:$0xff]
    %v218 = vld [vmem:[#allocation2 + $0x70] sm:$0xff]
    %v219 = vld [vmem:[#allocation2 + $0x78] sm:$0xff]
    %v220 = vld [vmem:[#allocation9] sm:$0xf]
    %v221 = vld [vmem:[#allocation9 + $0x4] sm:$0xf]
    %v222 = vld [vmem:[#allocation9 + $0x8] sm:$0xf]
    %v223 = vld [vmem:[#allocation9 + $0xc] sm:$0xf]
    %v224 = vld [vmem:[#allocation9 + $0x10] sm:$0xf]
    %v225 = vld [vmem:[#allocation9 + $0x14] sm:$0xf]
    %v226 = vld [vmem:[#allocation9 + $0x18] sm:$0xf]
    %v227 = vld [vmem:[#allocation9 + $0x1c] sm:$0xf]
    %v228 = vld [vmem:[#allocation9 + $0x20] sm:$0xf]
    %v229 = vld [vmem:[#allocation9 + $0x24] sm:$0xf]
    %v230 = vld [vmem:[#allocation9 + $0x28] sm:$0xf]
    %v231 = vld [vmem:[#allocation9 + $0x2c] sm:$0xf]
    %v232 = vld [vmem:[#allocation9 + $0x30] sm:$0xf]
    %v233 = vld [vmem:[#allocation9 + $0x34] sm:$0xf]
    %v234 = vld [vmem:[#allocation9 + $0x38] sm:$0xf]
    %v235 = vld [vmem:[#allocation9 + $0x3c] sm:$0xf]
    %v236 = vld [vmem:[#allocation11] sm:$0xf]
    %v237 = vld [vmem:[#allocation11 + $0x4] sm:$0xf]
    %v238 = vld [vmem:[#allocation11 + $0x8] sm:$0xf]
    %v239 = vld [vmem:[#allocation11 + $0xc] sm:$0xf]
    %v240 = vld [vmem:[#allocation11 + $0x10] sm:$0xf]
    %v241 = vld [vmem:[#allocation11 + $0x14] sm:$0xf]
    %v242 = vld [vmem:[#allocation11 + $0x18] sm:$0xf]
    %v243 = vld [vmem:[#allocation11 + $0x1c] sm:$0xf]
    %v244 = vld [vmem:[#allocation11 + $0x20] sm:$0xf]
    %v245 = vld [vmem:[#allocation11 + $0x24] sm:$0xf]
    %v246 = vld [vmem:[#allocation11 + $0x28] sm:$0xf]
    %v247 = vld [vmem:[#allocation11 + $0x2c] sm:$0xf]
    %v248 = vld [vmem:[#allocation11 + $0x30] sm:$0xf]
    %v249 = vld [vmem:[#allocation11 + $0x34] sm:$0xf]
    %v250 = vld [vmem:[#allocation11 + $0x38] sm:$0xf]
    %v251 = vld [vmem:[#allocation11 + $0x3c] sm:$0xf]
    %v268 = vunpack.c.l.b16 %v220
    %v269 = vunpack.c.l.b16 %v221
    %v270 = vunpack.c.l.b16 %v222
    %v271 = vunpack.c.l.b16 %v223
    %v272 = vunpack.c.l.b16 %v224
    %v273 = vunpack.c.l.b16 %v225
    %v274 = vunpack.c.l.b16 %v226
    %v275 = vunpack.c.l.b16 %v227
    %v276 = vunpack.c.l.b16 %v228
    %v277 = vunpack.c.l.b16 %v229
    %v278 = vunpack.c.l.b16 %v230
    %v279 = vunpack.c.l.b16 %v231
    %v280 = vunpack.c.l.b16 %v232
    %v281 = vunpack.c.l.b16 %v233
    %v282 = vunpack.c.l.b16 %v234
    %v283 = vunpack.c.l.b16 %v235
    %v284 = vpack.c.b16 %v269, %v268
    %v285 = vpack.c.b16 %v271, %v270
    %v286 = vpack.c.b16 %v273, %v272
    %v287 = vpack.c.b16 %v275, %v274
    %v288 = vpack.c.b16 %v277, %v276
    %v289 = vpack.c.b16 %v279, %v278
    %v290 = vpack.c.b16 %v281, %v280
    %v291 = vpack.c.b16 %v283, %v282
    %v316 = vunpack.c.l.b16 %v236
    %v317 = vunpack.c.l.b16 %v237
    %v318 = vunpack.c.l.b16 %v238
    %v319 = vunpack.c.l.b16 %v239
    %v320 = vunpack.c.l.b16 %v240
    %v321 = vunpack.c.l.b16 %v241
    %v322 = vunpack.c.l.b16 %v242
    %v323 = vunpack.c.l.b16 %v243
    %v324 = vunpack.c.l.b16 %v244
    %v325 = vunpack.c.l.b16 %v245
    %v326 = vunpack.c.l.b16 %v246
    %v327 = vunpack.c.l.b16 %v247
    %v328 = vunpack.c.l.b16 %v248
    %v329 = vunpack.c.l.b16 %v249
    %v330 = vunpack.c.l.b16 %v250
    %v331 = vunpack.c.l.b16 %v251
    %v332 = vpack.c.b16 %v317, %v316
    %v333 = vpack.c.b16 %v319, %v318
    %v334 = vpack.c.b16 %v321, %v320
    %v335 = vpack.c.b16 %v323, %v322
    %v336 = vpack.c.b16 %v325, %v324
    %v337 = vpack.c.b16 %v327, %v326
    %v338 = vpack.c.b16 %v329, %v328
    %v339 = vpack.c.b16 %v331, %v330
    %348 = vmatpush.bf16.xpose.msra.mxu0 %v339
    %349 = vmatpush.bf16.xpose.msra.mxu0 %v338
    %350 = vmatpush.bf16.xpose.msra.mxu0 %v337
    %351 = vmatpush.bf16.xpose.msra.mxu0 %v336
    %352 = vmatpush.bf16.xpose.msra.mxu0 %v335
    %353 = vmatpush.bf16.xpose.msra.mxu0 %v334
    %354 = vmatpush.bf16.xpose.msra.mxu0 %v333
    %355 = vmatpush.bf16.xpose.msra.mxu0 %v332
    %356 = vmatmul.bf16.gmra.mxu0 %v284
    %v357 = vpop.f32.mrf.mxu0
    %v358 = vadd.f32 0.0, %v357
    %v359 = vpop.f32.mrf.mxu0
    %v360 = vadd.f32 0.0, %v359
    %361 = vmatmul.bf16.gmra.mxu0 %v285
    %v362 = vpop.f32.mrf.mxu0
    %v363 = vadd.f32 0.0, %v362
    %v364 = vpop.f32.mrf.mxu0
    %v365 = vadd.f32 0.0, %v364
    %366 = vmatmul.bf16.gmra.mxu0 %v286
    %v367 = vpop.f32.mrf.mxu0
    %v368 = vadd.f32 0.0, %v367
    %v369 = vpop.f32.mrf.mxu0
    %v370 = vadd.f32 0.0, %v369
    %371 = vmatmul.bf16.gmra.mxu0 %v287
    %v372 = vpop.f32.mrf.mxu0
    %v373 = vadd.f32 0.0, %v372
    %v374 = vpop.f32.mrf.mxu0
    %v375 = vadd.f32 0.0, %v374
    %376 = vmatmul.bf16.gmra.mxu0 %v288
    %v377 = vpop.f32.mrf.mxu0
    %v378 = vadd.f32 0.0, %v377
    %v379 = vpop.f32.mrf.mxu0
    %v380 = vadd.f32 0.0, %v379
    %381 = vmatmul.bf16.gmra.mxu0 %v289
    %v382 = vpop.f32.mrf.mxu0
    %v383 = vadd.f32 0.0, %v382
    %v384 = vpop.f32.mrf.mxu0
    %v385 = vadd.f32 0.0, %v384
    %386 = vmatmul.bf16.gmra.mxu0 %v290
    %v387 = vpop.f32.mrf.mxu0
    %v388 = vadd.f32 0.0, %v387
    %v389 = vpop.f32.mrf.mxu0
    %v390 = vadd.f32 0.0, %v389
    %391 = vmatmul.bf16.gmra.mxu0 %v291
    %v392 = vpop.f32.mrf.mxu0
    %v393 = vadd.f32 0.0, %v392
    %v394 = vpop.f32.mrf.mxu0
    %v395 = vadd.f32 0.0, %v394
    %396 = vdwg.mxu0
    %v397 = vadd.f32 %v204, %v358
    %v398 = vadd.f32 %v205, %v360
    %v399 = vadd.f32 %v206, %v363
    %v400 = vadd.f32 %v207, %v365
    %v401 = vadd.f32 %v208, %v368
    %v402 = vadd.f32 %v209, %v370
    %v403 = vadd.f32 %v210, %v373
    %v404 = vadd.f32 %v211, %v375
    %v405 = vadd.f32 %v212, %v378
    %v406 = vadd.f32 %v213, %v380
    %v407 = vadd.f32 %v214, %v383
    %v408 = vadd.f32 %v215, %v385
    %v409 = vadd.f32 %v216, %v388
    %v410 = vadd.f32 %v217, %v390
    %v411 = vadd.f32 %v218, %v393
    %v412 = vadd.f32 %v219, %v395
    %413 = vst [vmem:[#allocation2] sm:$0xff] %v397
    %414 = vst [vmem:[#allocation2 + $0x8] sm:$0xff] %v398
    %415 = vst [vmem:[#allocation2 + $0x10] sm:$0xff] %v399
    %416 = vst [vmem:[#allocation2 + $0x18] sm:$0xff] %v400
    %417 = vst [vmem:[#allocation2 + $0x20] sm:$0xff] %v401
    %418 = vst [vmem:[#allocation2 + $0x28] sm:$0xff] %v402
    %419 = vst [vmem:[#allocation2 + $0x30] sm:$0xff] %v403
    %420 = vst [vmem:[#allocation2 + $0x38] sm:$0xff] %v404
    %421 = vst [vmem:[#allocation2 + $0x40] sm:$0xff] %v405
    %422 = vst [vmem:[#allocation2 + $0x48] sm:$0xff] %v406
    %423 = vst [vmem:[#allocation2 + $0x50] sm:$0xff] %v407
    %424 = vst [vmem:[#allocation2 + $0x58] sm:$0xff] %v408
    %425 = vst [vmem:[#allocation2 + $0x60] sm:$0xff] %v409
    %426 = vst [vmem:[#allocation2 + $0x68] sm:$0xff] %v410
    %427 = vst [vmem:[#allocation2 + $0x70] sm:$0xff] %v411
    %428 = vst [vmem:[#allocation2 + $0x78] sm:$0xff] %v412
    // Predicated region
    $region70: #{tpu_custom_call.1} parent=1 // pred_check
      %p429 = pneg %p132
    $region71: #{tpu_custom_call.1} parent=1 // pred_check_branch
      %431 = sbr.rel (%p429) target = $region73
    $region72: #{tpu_custom_call.1} parent=1 // pred_region
      %v432 = vld [vmem:[#allocation2] sm:$0xff]
      %v433 = vld [vmem:[#allocation2 + $0x8] sm:$0xff]
      %v434 = vld [vmem:[#allocation2 + $0x10] sm:$0xff]
      %v435 = vld [vmem:[#allocation2 + $0x18] sm:$0xff]
      %v436 = vld [vmem:[#allocation2 + $0x20] sm:$0xff]
      %v437 = vld [vmem:[#allocation2 + $0x28] sm:$0xff]
      %v438 = vld [vmem:[#allocation2 + $0x30] sm:$0xff]
      %v439 = vld [vmem:[#allocation2 + $0x38] sm:$0xff]
      %v440 = vld [vmem:[#allocation2 + $0x40] sm:$0xff]
      %v441 = vld [vmem:[#allocation2 + $0x48] sm:$0xff]
      %v442 = vld [vmem:[#allocation2 + $0x50] sm:$0xff]
      %v443 = vld [vmem:[#allocation2 + $0x58] sm:$0xff]
      %v444 = vld [vmem:[#allocation2 + $0x60] sm:$0xff]
      %v445 = vld [vmem:[#allocation2 + $0x68] sm:$0xff]
      %v446 = vld [vmem:[#allocation2 + $0x70] sm:$0xff]
      %v447 = vld [vmem:[#allocation2 + $0x78] sm:$0xff]
      %v448 = vld [vmem:[#allocation12] sm:$0xf]
      %v449 = vld [vmem:[#allocation12 + $0x4] sm:$0xf]
      %v450 = vld [vmem:[#allocation12 + $0x8] sm:$0xf]
      %v451 = vld [vmem:[#allocation12 + $0xc] sm:$0xf]
      %v452 = vld [vmem:[#allocation12 + $0x10] sm:$0xf]
      %v453 = vld [vmem:[#allocation12 + $0x14] sm:$0xf]
      %v454 = vld [vmem:[#allocation12 + $0x18] sm:$0xf]
      %v455 = vld [vmem:[#allocation12 + $0x1c] sm:$0xf]
      %v456 = vld [vmem:[#allocation12 + $0x20] sm:$0xf]
      %v457 = vld [vmem:[#allocation12 + $0x24] sm:$0xf]
      %v458 = vld [vmem:[#allocation12 + $0x28] sm:$0xf]
      %v459 = vld [vmem:[#allocation12 + $0x2c] sm:$0xf]
      %v460 = vld [vmem:[#allocation12 + $0x30] sm:$0xf]
      %v461 = vld [vmem:[#allocation12 + $0x34] sm:$0xf]
      %v462 = vld [vmem:[#allocation12 + $0x38] sm:$0xf]
      %v463 = vld [vmem:[#allocation12 + $0x3c] sm:$0xf]
      %v464 = vunpack.c.l.bf16 %v448
      %v465 = vunpack.c.l.bf16 %v449
      %v466 = vunpack.c.l.bf16 %v450
      %v467 = vunpack.c.l.bf16 %v451
      %v468 = vunpack.c.l.bf16 %v452
      %v469 = vunpack.c.l.bf16 %v453
      %v470 = vunpack.c.l.bf16 %v454
      %v471 = vunpack.c.l.bf16 %v455
      %v472 = vunpack.c.l.bf16 %v456
      %v473 = vunpack.c.l.bf16 %v457
      %v474 = vunpack.c.l.bf16 %v458
      %v475 = vunpack.c.l.bf16 %v459
      %v476 = vunpack.c.l.bf16 %v460
      %v477 = vunpack.c.l.bf16 %v461
      %v478 = vunpack.c.l.bf16 %v462
      %v479 = vunpack.c.l.bf16 %v463
      %v480 = vld [vmem:[%s7] sm:$0xff]
      %v481 = vld [vmem:[%s7 + $0x8] sm:$0xff]
      %v482 = vld [vmem:[%s7 + $0x10] sm:$0xff]
      %v483 = vld [vmem:[%s7 + $0x18] sm:$0xff]
      %v484 = vld [vmem:[%s7 + $0x20] sm:$0xff]
      %v485 = vld [vmem:[%s7 + $0x28] sm:$0xff]
      %v486 = vld [vmem:[%s7 + $0x30] sm:$0xff]
      %v487 = vld [vmem:[%s7 + $0x38] sm:$0xff]
      %v488 = vld [vmem:[%s7 + $0x40] sm:$0xff]
      %v489 = vld [vmem:[%s7 + $0x48] sm:$0xff]
      %v490 = vld [vmem:[%s7 + $0x50] sm:$0xff]
      %v491 = vld [vmem:[%s7 + $0x58] sm:$0xff]
      %v492 = vld [vmem:[%s7 + $0x60] sm:$0xff]
      %v493 = vld [vmem:[%s7 + $0x68] sm:$0xff]
      %v494 = vld [vmem:[%s7 + $0x70] sm:$0xff]
      %v495 = vld [vmem:[%s7 + $0x78] sm:$0xff]
      %497 = vset.pattern.permute.xlu0 0
      %498 = vperm.xlu0 %497, %v480
      %v499 = vpop.permute.xlu0 %498
      %502 = vset.pattern.permute.xlu0 0
      %503 = vperm.xlu0 %502, %v481
      %v504 = vpop.permute.xlu0 %503
      %507 = vset.pattern.permute.xlu0 0
      %508 = vperm.xlu0 %507, %v482
      %v509 = vpop.permute.xlu0 %508
      %512 = vset.pattern.permute.xlu0 0
      %513 = vperm.xlu0 %512, %v483
      %v514 = vpop.permute.xlu0 %513
      %517 = vset.pattern.permute.xlu0 0
      %518 = vperm.xlu0 %517, %v484
      %v519 = vpop.permute.xlu0 %518
      %522 = vset.pattern.permute.xlu0 0
      %523 = vperm.xlu0 %522, %v485
      %v524 = vpop.permute.xlu0 %523
      %527 = vset.pattern.permute.xlu0 0
      %528 = vperm.xlu0 %527, %v486
      %v529 = vpop.permute.xlu0 %528
      %532 = vset.pattern.permute.xlu0 0
      %533 = vperm.xlu0 %532, %v487
      %v534 = vpop.permute.xlu0 %533
      %537 = vset.pattern.permute.xlu0 0
      %538 = vperm.xlu0 %537, %v488
      %v539 = vpop.permute.xlu0 %538
      %542 = vset.pattern.permute.xlu0 0
      %543 = vperm.xlu0 %542, %v489
      %v544 = vpop.permute.xlu0 %543
      %547 = vset.pattern.permute.xlu0 0
      %548 = vperm.xlu0 %547, %v490
      %v549 = vpop.permute.xlu0 %548
      %552 = vset.pattern.permute.xlu0 0
      %553 = vperm.xlu0 %552, %v491
      %v554 = vpop.permute.xlu0 %553
      %557 = vset.pattern.permute.xlu0 0
      %558 = vperm.xlu0 %557, %v492
      %v559 = vpop.permute.xlu0 %558
      %562 = vset.pattern.permute.xlu0 0
      %563 = vperm.xlu0 %562, %v493
      %v564 = vpop.permute.xlu0 %563
      %567 = vset.pattern.permute.xlu0 0
      %568 = vperm.xlu0 %567, %v494
      %v569 = vpop.permute.xlu0 %568
      %572 = vset.pattern.permute.xlu0 0
      %573 = vperm.xlu0 %572, %v495
      %v574 = vpop.permute.xlu0 %573
      %v576 = vsub.f32 %v499, %v432
      %v577 = vsub.f32 %v504, %v433
      %v578 = vsub.f32 %v509, %v434
      %v579 = vsub.f32 %v514, %v435
      %v580 = vsub.f32 %v519, %v436
      %v581 = vsub.f32 %v524, %v437
      %v582 = vsub.f32 %v529, %v438
      %v583 = vsub.f32 %v534, %v439
      %v584 = vsub.f32 %v539, %v440
      %v585 = vsub.f32 %v544, %v441
      %v586 = vsub.f32 %v549, %v442
      %v587 = vsub.f32 %v554, %v443
      %v588 = vsub.f32 %v559, %v444
      %v589 = vsub.f32 %v564, %v445
      %v590 = vsub.f32 %v569, %v446
      %v591 = vsub.f32 %v574, %v447
      %v592 = vld [vmem:[%s8] sm:$0x1]
      %v593 = vsub.f32 1.0, %v592
      %v595 = vperm.slane %v593, 0
      %v597 = vmul.f32 %v464, %v595
      %v598 = vmul.f32 %v465, %v595
      %v599 = vmul.f32 %v466, %v595
      %v600 = vmul.f32 %v467, %v595
      %v601 = vmul.f32 %v468, %v595
      %v602 = vmul.f32 %v469, %v595
      %v603 = vmul.f32 %v470, %v595
      %v604 = vmul.f32 %v471, %v595
      %v605 = vmul.f32 %v472, %v595
      %v606 = vmul.f32 %v473, %v595
      %v607 = vmul.f32 %v474, %v595
      %v608 = vmul.f32 %v475, %v595
      %v609 = vmul.f32 %v476, %v595
      %v610 = vmul.f32 %v477, %v595
      %v611 = vmul.f32 %v478, %v595
      %v612 = vmul.f32 %v479, %v595
      %v613 = vsub.f32 %v576, %v597
      %v614 = vsub.f32 %v577, %v598
      %v615 = vsub.f32 %v578, %v599
      %v616 = vsub.f32 %v579, %v600
      %v617 = vsub.f32 %v580, %v601
      %v618 = vsub.f32 %v581, %v602
      %v619 = vsub.f32 %v582, %v603
      %v620 = vsub.f32 %v583, %v604
      %v621 = vsub.f32 %v584, %v605
      %v622 = vsub.f32 %v585, %v606
      %v623 = vsub.f32 %v586, %v607
      %v624 = vsub.f32 %v587, %v608
      %v625 = vsub.f32 %v588, %v609
      %v626 = vsub.f32 %v589, %v610
      %v627 = vsub.f32 %v590, %v611
      %v628 = vsub.f32 %v591, %v612
      %v629 = vld [vmem:[%s0] sm:$0xff]
      %v630 = vld [vmem:[%s0 + $0x8] sm:$0xff]
      %v631 = vld [vmem:[%s0 + $0x10] sm:$0xff]
      %v632 = vld [vmem:[%s0 + $0x18] sm:$0xff]
      %v633 = vld [vmem:[%s0 + $0x20] sm:$0xff]
      %v634 = vld [vmem:[%s0 + $0x28] sm:$0xff]
      %v635 = vld [vmem:[%s0 + $0x30] sm:$0xff]
      %v636 = vld [vmem:[%s0 + $0x38] sm:$0xff]
      %v637 = vld [vmem:[%s0 + $0x40] sm:$0xff]
      %v638 = vld [vmem:[%s0 + $0x48] sm:$0xff]
      %v639 = vld [vmem:[%s0 + $0x50] sm:$0xff]
      %v640 = vld [vmem:[%s0 + $0x58] sm:$0xff]
      %v641 = vld [vmem:[%s0 + $0x60] sm:$0xff]
      %v642 = vld [vmem:[%s0 + $0x68] sm:$0xff]
      %v643 = vld [vmem:[%s0 + $0x70] sm:$0xff]
      %v644 = vld [vmem:[%s0 + $0x78] sm:$0xff]
      %v645 = vld [vmem:[#allocation6] sm:$0xff]
      %v646 = vld [vmem:[#allocation6 + $0x8] sm:$0xff]
      %v647 = vld [vmem:[#allocation6 + $0x10] sm:$0xff]
      %v648 = vld [vmem:[#allocation6 + $0x18] sm:$0xff]
      %v649 = vld [vmem:[#allocation6 + $0x20] sm:$0xff]
      %v650 = vld [vmem:[#allocation6 + $0x28] sm:$0xff]
      %v651 = vld [vmem:[#allocation6 + $0x30] sm:$0xff]
      %v652 = vld [vmem:[#allocation6 + $0x38] sm:$0xff]
      %v653 = vld [vmem:[#allocation6 + $0x40] sm:$0xff]
      %v654 = vld [vmem:[#allocation6 + $0x48] sm:$0xff]
      %v655 = vld [vmem:[#allocation6 + $0x50] sm:$0xff]
      %v656 = vld [vmem:[#allocation6 + $0x58] sm:$0xff]
      %v657 = vld [vmem:[#allocation6 + $0x60] sm:$0xff]
      %v658 = vld [vmem:[#allocation6 + $0x68] sm:$0xff]
      %v659 = vld [vmem:[#allocation6 + $0x70] sm:$0xff]
      %v660 = vld [vmem:[#allocation6 + $0x78] sm:$0xff]
      %vm661 = vcmp.gt.f32.partialorder %v613, 0.0
      %vm662 = vcmp.gt.f32.partialorder %v614, 0.0
      %vm663 = vcmp.gt.f32.partialorder %v615, 0.0
      %vm664 = vcmp.gt.f32.partialorder %v616, 0.0
      %vm665 = vcmp.gt.f32.partialorder %v617, 0.0
      %vm666 = vcmp.gt.f32.partialorder %v618, 0.0
      %vm667 = vcmp.gt.f32.partialorder %v619, 0.0
      %vm668 = vcmp.gt.f32.partialorder %v620, 0.0
      %vm669 = vcmp.gt.f32.partialorder %v621, 0.0
      %vm670 = vcmp.gt.f32.partialorder %v622, 0.0
      %vm671 = vcmp.gt.f32.partialorder %v623, 0.0
      %vm672 = vcmp.gt.f32.partialorder %v624, 0.0
      %vm673 = vcmp.gt.f32.partialorder %v625, 0.0
      %vm674 = vcmp.gt.f32.partialorder %v626, 0.0
      %vm675 = vcmp.gt.f32.partialorder %v627, 0.0
      %vm676 = vcmp.gt.f32.partialorder %v628, 0.0
      %v677 = vsel %vm661, 1, 0
      %v678 = vsel %vm662, 1, 0
      %v679 = vsel %vm663, 1, 0
      %v680 = vsel %vm664, 1, 0
      %v681 = vsel %vm665, 1, 0
      %v682 = vsel %vm666, 1, 0
      %v683 = vsel %vm667, 1, 0
      %v684 = vsel %vm668, 1, 0
      %v685 = vsel %vm669, 1, 0
      %v686 = vsel %vm670, 1, 0
      %v687 = vsel %vm671, 1, 0
      %v688 = vsel %vm672, 1, 0
      %v689 = vsel %vm673, 1, 0
      %v690 = vsel %vm674, 1, 0
      %v691 = vsel %vm675, 1, 0
      %v692 = vsel %vm676, 1, 0
      %v693 = vcvt.s32.f32 %v677
      %v694 = vcvt.s32.f32 %v678
      %v695 = vcvt.s32.f32 %v679
      %v696 = vcvt.s32.f32 %v680
      %v697 = vcvt.s32.f32 %v681
      %v698 = vcvt.s32.f32 %v682
      %v699 = vcvt.s32.f32 %v683
      %v700 = vcvt.s32.f32 %v684
      %v701 = vcvt.s32.f32 %v685
      %v702 = vcvt.s32.f32 %v686
      %v703 = vcvt.s32.f32 %v687
      %v704 = vcvt.s32.f32 %v688
      %v705 = vcvt.s32.f32 %v689
      %v706 = vcvt.s32.f32 %v690
      %v707 = vcvt.s32.f32 %v691
      %v708 = vcvt.s32.f32 %v692
      %v709 = vpack.c.bf16 %v693, %v693
      %v710 = vpack.c.bf16 %v694, %v694
      %v711 = vpack.c.bf16 %v695, %v695
      %v712 = vpack.c.bf16 %v696, %v696
      %v713 = vpack.c.bf16 %v697, %v697
      %v714 = vpack.c.bf16 %v698, %v698
      %v715 = vpack.c.bf16 %v699, %v699
      %v716 = vpack.c.bf16 %v700, %v700
      %v717 = vpack.c.bf16 %v701, %v701
      %v718 = vpack.c.bf16 %v702, %v702
      %v719 = vpack.c.bf16 %v703, %v703
      %v720 = vpack.c.bf16 %v704, %v704
      %v721 = vpack.c.bf16 %v705, %v705
      %v722 = vpack.c.bf16 %v706, %v706
      %v723 = vpack.c.bf16 %v707, %v707
      %v724 = vpack.c.bf16 %v708, %v708
      %vm725 = vcmp.gt.f32.partialorder %v432, 0.0
      %vm726 = vcmp.gt.f32.partialorder %v433, 0.0
      %vm727 = vcmp.gt.f32.partialorder %v434, 0.0
      %vm728 = vcmp.gt.f32.partialorder %v435, 0.0
      %vm729 = vcmp.gt.f32.partialorder %v436, 0.0
      %vm730 = vcmp.gt.f32.partialorder %v437, 0.0
      %vm731 = vcmp.gt.f32.partialorder %v438, 0.0
      %vm732 = vcmp.gt.f32.partialorder %v439, 0.0
      %vm733 = vcmp.gt.f32.partialorder %v440, 0.0
      %vm734 = vcmp.gt.f32.partialorder %v441, 0.0
      %vm735 = vcmp.gt.f32.partialorder %v442, 0.0
      %vm736 = vcmp.gt.f32.partialorder %v443, 0.0
      %vm737 = vcmp.gt.f32.partialorder %v444, 0.0
      %vm738 = vcmp.gt.f32.partialorder %v445, 0.0
      %vm739 = vcmp.gt.f32.partialorder %v446, 0.0
      %vm740 = vcmp.gt.f32.partialorder %v447, 0.0
      %v741 = vsel %vm725, 1, 0
      %v742 = vsel %vm726, 1, 0
      %v743 = vsel %vm727, 1, 0
      %v744 = vsel %vm728, 1, 0
      %v745 = vsel %vm729, 1, 0
      %v746 = vsel %vm730, 1, 0
      %v747 = vsel %vm731, 1, 0
      %v748 = vsel %vm732, 1, 0
      %v749 = vsel %vm733, 1, 0
      %v750 = vsel %vm734, 1, 0
      %v751 = vsel %vm735, 1, 0
      %v752 = vsel %vm736, 1, 0
      %v753 = vsel %vm737, 1, 0
      %v754 = vsel %vm738, 1, 0
      %v755 = vsel %vm739, 1, 0
      %v756 = vsel %vm740, 1, 0
      %v757 = vcvt.s32.f32 %v741
      %v758 = vcvt.s32.f32 %v742
      %v759 = vcvt.s32.f32 %v743
      %v760 = vcvt.s32.f32 %v744
      %v761 = vcvt.s32.f32 %v745
      %v762 = vcvt.s32.f32 %v746
      %v763 = vcvt.s32.f32 %v747
      %v764 = vcvt.s32.f32 %v748
      %v765 = vcvt.s32.f32 %v749
      %v766 = vcvt.s32.f32 %v750
      %v767 = vcvt.s32.f32 %v751
      %v768 = vcvt.s32.f32 %v752
      %v769 = vcvt.s32.f32 %v753
      %v770 = vcvt.s32.f32 %v754
      %v771 = vcvt.s32.f32 %v755
      %v772 = vcvt.s32.f32 %v756
      %v773 = vpack.c.bf16 %v757, %v757
      %v774 = vpack.c.bf16 %v758, %v758
      %v775 = vpack.c.bf16 %v759, %v759
      %v776 = vpack.c.bf16 %v760, %v760
      %v777 = vpack.c.bf16 %v761, %v761
      %v778 = vpack.c.bf16 %v762, %v762
      %v779 = vpack.c.bf16 %v763, %v763
      %v780 = vpack.c.bf16 %v764, %v764
      %v781 = vpack.c.bf16 %v765, %v765
      %v782 = vpack.c.bf16 %v766, %v766
      %v783 = vpack.c.bf16 %v767, %v767
      %v784 = vpack.c.bf16 %v768, %v768
      %v785 = vpack.c.bf16 %v769, %v769
      %v786 = vpack.c.bf16 %v770, %v770
      %v787 = vpack.c.bf16 %v771, %v771
      %v788 = vpack.c.bf16 %v772, %v772
      %v805 = vunpack.c.l.b16 %v709
      %v806 = vunpack.c.l.b16 %v710
      %v807 = vunpack.c.l.b16 %v711
      %v808 = vunpack.c.l.b16 %v712
      %v809 = vunpack.c.l.b16 %v713
      %v810 = vunpack.c.l.b16 %v714
      %v811 = vunpack.c.l.b16 %v715
      %v812 = vunpack.c.l.b16 %v716
      %v813 = vunpack.c.l.b16 %v717
      %v814 = vunpack.c.l.b16 %v718
      %v815 = vunpack.c.l.b16 %v719
      %v816 = vunpack.c.l.b16 %v720
      %v817 = vunpack.c.l.b16 %v721
      %v818 = vunpack.c.l.b16 %v722
      %v819 = vunpack.c.l.b16 %v723
      %v820 = vunpack.c.l.b16 %v724
      %v821 = vpack.c.b16 %v806, %v805
      %v822 = vpack.c.b16 %v808, %v807
      %v823 = vpack.c.b16 %v810, %v809
      %v824 = vpack.c.b16 %v812, %v811
      %v825 = vpack.c.b16 %v814, %v813
      %v826 = vpack.c.b16 %v816, %v815
      %v827 = vpack.c.b16 %v818, %v817
      %v828 = vpack.c.b16 %v820, %v819
      %v853 = vunpack.c.l.b16 %v773
      %v854 = vunpack.c.l.b16 %v774
      %v855 = vunpack.c.l.b16 %v775
      %v856 = vunpack.c.l.b16 %v776
      %v857 = vunpack.c.l.b16 %v777
      %v858 = vunpack.c.l.b16 %v778
      %v859 = vunpack.c.l.b16 %v779
      %v860 = vunpack.c.l.b16 %v780
      %v861 = vunpack.c.l.b16 %v781
      %v862 = vunpack.c.l.b16 %v782
      %v863 = vunpack.c.l.b16 %v783
      %v864 = vunpack.c.l.b16 %v784
      %v865 = vunpack.c.l.b16 %v785
      %v866 = vunpack.c.l.b16 %v786
      %v867 = vunpack.c.l.b16 %v787
      %v868 = vunpack.c.l.b16 %v788
      %v869 = vpack.c.b16 %v854, %v853
      %v870 = vpack.c.b16 %v856, %v855
      %v871 = vpack.c.b16 %v858, %v857
      %v872 = vpack.c.b16 %v860, %v859
      %v873 = vpack.c.b16 %v862, %v861
      %v874 = vpack.c.b16 %v864, %v863
      %v875 = vpack.c.b16 %v866, %v865
      %v876 = vpack.c.b16 %v868, %v867
      %v885 = vpack.c.bf16 %v646, %v645
      %v886 = vpack.c.bf16 %v648, %v647
      %v887 = vpack.c.bf16 %v650, %v649
      %v888 = vpack.c.bf16 %v652, %v651
      %v889 = vpack.c.bf16 %v654, %v653
      %v890 = vpack.c.bf16 %v656, %v655
      %v891 = vpack.c.bf16 %v658, %v657
      %v892 = vpack.c.bf16 %v660, %v659
      %893 = vmatpush.bf16.msra.mxu0 %v892
      %894 = vmatpush.bf16.msra.mxu0 %v891
      %895 = vmatpush.bf16.msra.mxu0 %v890
      %896 = vmatpush.bf16.msra.mxu0 %v889
      %897 = vmatpush.bf16.msra.mxu0 %v888
      %898 = vmatpush.bf16.msra.mxu0 %v887
      %899 = vmatpush.bf16.msra.mxu0 %v886
      %900 = vmatpush.bf16.msra.mxu0 %v885
      %901 = vmatmul.bf16.gmra.mxu0 %v821
      %v902 = vpop.f32.mrf.mxu0
      %v903 = vadd.f32 0.0, %v902
      %v904 = vpop.f32.mrf.mxu0
      %v905 = vadd.f32 0.0, %v904
      %906 = vmatmul.bf16.gmra.mxu0 %v822
      %v907 = vpop.f32.mrf.mxu0
      %v908 = vadd.f32 0.0, %v907
      %v909 = vpop.f32.mrf.mxu0
      %v910 = vadd.f32 0.0, %v909
      %911 = vmatmul.bf16.gmra.mxu0 %v823
      %v912 = vpop.f32.mrf.mxu0
      %v913 = vadd.f32 0.0, %v912
      %v914 = vpop.f32.mrf.mxu0
      %v915 = vadd.f32 0.0, %v914
      %916 = vmatmul.bf16.gmra.mxu0 %v824
      %v917 = vpop.f32.mrf.mxu0
      %v918 = vadd.f32 0.0, %v917
      %v919 = vpop.f32.mrf.mxu0
      %v920 = vadd.f32 0.0, %v919
      %921 = vmatmul.bf16.gmra.mxu0 %v825
      %v922 = vpop.f32.mrf.mxu0
      %v923 = vadd.f32 0.0, %v922
      %v924 = vpop.f32.mrf.mxu0
      %v925 = vadd.f32 0.0, %v924
      %926 = vmatmul.bf16.gmra.mxu0 %v826
      %v927 = vpop.f32.mrf.mxu0
      %v928 = vadd.f32 0.0, %v927
      %v929 = vpop.f32.mrf.mxu0
      %v930 = vadd.f32 0.0, %v929
      %931 = vmatmul.bf16.gmra.mxu0 %v827
      %v932 = vpop.f32.mrf.mxu0
      %v933 = vadd.f32 0.0, %v932
      %v934 = vpop.f32.mrf.mxu0
      %v935 = vadd.f32 0.0, %v934
      %936 = vmatmul.bf16.gmra.mxu0 %v828
      %v937 = vpop.f32.mrf.mxu0
      %v938 = vadd.f32 0.0, %v937
      %v939 = vpop.f32.mrf.mxu0
      %v940 = vadd.f32 0.0, %v939
      %941 = vmatmul.bf16.gmra.mxu0 %v869
      %v942 = vpop.f32.mrf.mxu0
      %v943 = vadd.f32 0.0, %v942
      %v944 = vpop.f32.mrf.mxu0
      %v945 = vadd.f32 0.0, %v944
      %946 = vmatmul.bf16.gmra.mxu0 %v870
      %v947 = vpop.f32.mrf.mxu0
      %v948 = vadd.f32 0.0, %v947
      %v949 = vpop.f32.mrf.mxu0
      %v950 = vadd.f32 0.0, %v949
      %951 = vmatmul.bf16.gmra.mxu0 %v871
      %v952 = vpop.f32.mrf.mxu0
      %v953 = vadd.f32 0.0, %v952
      %v954 = vpop.f32.mrf.mxu0
      %v955 = vadd.f32 0.0, %v954
      %956 = vmatmul.bf16.gmra.mxu0 %v872
      %v957 = vpop.f32.mrf.mxu0
      %v958 = vadd.f32 0.0, %v957
      %v959 = vpop.f32.mrf.mxu0
      %v960 = vadd.f32 0.0, %v959
      %961 = vmatmul.bf16.gmra.mxu0 %v873
      %v962 = vpop.f32.mrf.mxu0
      %v963 = vadd.f32 0.0, %v962
      %v964 = vpop.f32.mrf.mxu0
      %v965 = vadd.f32 0.0, %v964
      %966 = vmatmul.bf16.gmra.mxu0 %v874
      %v967 = vpop.f32.mrf.mxu0
      %v968 = vadd.f32 0.0, %v967
      %v969 = vpop.f32.mrf.mxu0
      %v970 = vadd.f32 0.0, %v969
      %971 = vmatmul.bf16.gmra.mxu0 %v875
      %v972 = vpop.f32.mrf.mxu0
      %v973 = vadd.f32 0.0, %v972
      %v974 = vpop.f32.mrf.mxu0
      %v975 = vadd.f32 0.0, %v974
      %976 = vmatmul.bf16.gmra.mxu0 %v876
      %v977 = vpop.f32.mrf.mxu0
      %v978 = vadd.f32 0.0, %v977
      %v979 = vpop.f32.mrf.mxu0
      %v980 = vadd.f32 0.0, %v979
      %981 = vdwg.mxu0
      %v982 = vpack.c.bf16 %v630, %v629
      %v983 = vpack.c.bf16 %v632, %v631
      %v984 = vpack.c.bf16 %v634, %v633
      %v985 = vpack.c.bf16 %v636, %v635
      %v986 = vpack.c.bf16 %v638, %v637
      %v987 = vpack.c.bf16 %v640, %v639
      %v988 = vpack.c.bf16 %v642, %v641
      %v989 = vpack.c.bf16 %v644, %v643
      %v990 = vpack.c.bf16 %v905, %v903
      %v991 = vpack.c.bf16 %v945, %v943
      %v992 = vpack.c.bf16 %v910, %v908
      %v993 = vpack.c.bf16 %v950, %v948
      %v994 = vpack.c.bf16 %v915, %v913
      %v995 = vpack.c.bf16 %v955, %v953
      %v996 = vpack.c.bf16 %v920, %v918
      %v997 = vpack.c.bf16 %v960, %v958
      %v998 = vpack.c.bf16 %v925, %v923
      %v999 = vpack.c.bf16 %v965, %v963
      %v1000 = vpack.c.bf16 %v930, %v928
      %v1001 = vpack.c.bf16 %v970, %v968
      %v1002 = vpack.c.bf16 %v935, %v933
      %v1003 = vpack.c.bf16 %v975, %v973
      %v1004 = vpack.c.bf16 %v940, %v938
      %v1005 = vpack.c.bf16 %v980, %v978
      %1006 = vxpose.xlu0.c.b16.start [1/8] %v982, 128
      %1007 = vxpose.xlu0.c.b16.cont [2/8] %v983, 128
      %1008 = vxpose.xlu0.c.b16.cont [3/8] %v984, 128
      %1009 = vxpose.xlu0.c.b16.cont [4/8] %v985, 128
      %1010 = vxpose.xlu0.c.b16.cont [5/8] %v986, 128
      %1011 = vxpose.xlu0.c.b16.cont [6/8] %v987, 128
      %1012 = vxpose.xlu0.c.b16.cont [7/8] %v988, 128
      %1013 = vxpose.xlu0.c.b16.end [8/8] %v989, 128
      %v1014 = vpop.trf.xlu0
      %v1015 = vpop.trf.xlu0
      %v1016 = vpop.trf.xlu0
      %v1017 = vpop.trf.xlu0
      %v1018 = vpop.trf.xlu0
      %v1019 = vpop.trf.xlu0
      %v1020 = vpop.trf.xlu0
      %v1021 = vpop.trf.xlu0
      %1022 = vmatpush.bf16.msra.mxu0 %v1004
      %1023 = vmatpush.bf16.msra.mxu0 %v1002
      %1024 = vmatpush.bf16.msra.mxu0 %v1000
      %1025 = vmatpush.bf16.msra.mxu0 %v998
      %1026 = vmatpush.bf16.msra.mxu0 %v996
      %1027 = vmatpush.bf16.msra.mxu0 %v994
      %1028 = vmatpush.bf16.msra.mxu0 %v992
      %1029 = vmatpush.bf16.msra.mxu0 %v990
      %1030 = vmatmul.bf16.gmra.mxu0 %v1014
      %v1031 = vpop.f32.mrf.mxu0
      %v1032 = vadd.f32 0.0, %v1031
      %v1033 = vpop.f32.mrf.mxu0
      %v1034 = vadd.f32 0.0, %v1033
      %1035 = vmatmul.bf16.gmra.mxu0 %v1015
      %v1036 = vpop.f32.mrf.mxu0
      %v1037 = vadd.f32 0.0, %v1036
      %v1038 = vpop.f32.mrf.mxu0
      %v1039 = vadd.f32 0.0, %v1038
      %1040 = vmatmul.bf16.gmra.mxu0 %v1016
      %v1041 = vpop.f32.mrf.mxu0
      %v1042 = vadd.f32 0.0, %v1041
      %v1043 = vpop.f32.mrf.mxu0
      %v1044 = vadd.f32 0.0, %v1043
      %1045 = vmatmul.bf16.gmra.mxu0 %v1017
      %v1046 = vpop.f32.mrf.mxu0
      %v1047 = vadd.f32 0.0, %v1046
      %v1048 = vpop.f32.mrf.mxu0
      %v1049 = vadd.f32 0.0, %v1048
      %1050 = vmatmul.bf16.gmra.mxu0 %v1018
      %v1051 = vpop.f32.mrf.mxu0
      %v1052 = vadd.f32 0.0, %v1051
      %v1053 = vpop.f32.mrf.mxu0
      %v1054 = vadd.f32 0.0, %v1053
      %1055 = vmatmul.bf16.gmra.mxu0 %v1019
      %v1056 = vpop.f32.mrf.mxu0
      %v1057 = vadd.f32 0.0, %v1056
      %v1058 = vpop.f32.mrf.mxu0
      %v1059 = vadd.f32 0.0, %v1058
      %1060 = vmatmul.bf16.gmra.mxu0 %v1020
      %v1061 = vpop.f32.mrf.mxu0
      %v1062 = vadd.f32 0.0, %v1061
      %v1063 = vpop.f32.mrf.mxu0
      %v1064 = vadd.f32 0.0, %v1063
      %1065 = vmatmul.bf16.gmra.mxu0 %v1021
      %v1066 = vpop.f32.mrf.mxu0
      %v1067 = vadd.f32 0.0, %v1066
      %v1068 = vpop.f32.mrf.mxu0
      %v1069 = vadd.f32 0.0, %v1068
      %1070 = vdwg.mxu0
      %1071 = vmatpush.bf16.msra.mxu0 %v1005
      %1072 = vmatpush.bf16.msra.mxu0 %v1003
      %1073 = vmatpush.bf16.msra.mxu0 %v1001
      %1074 = vmatpush.bf16.msra.mxu0 %v999
      %1075 = vmatpush.bf16.msra.mxu0 %v997
      %1076 = vmatpush.bf16.msra.mxu0 %v995
      %1077 = vmatpush.bf16.msra.mxu0 %v993
      %1078 = vmatpush.bf16.msra.mxu0 %v991
      %1079 = vmatmul.bf16.gmra.mxu0 %v1014
      %v1080 = vpop.f32.mrf.mxu0
      %v1081 = vadd.f32 0.0, %v1080
      %v1082 = vpop.f32.mrf.mxu0
      %v1083 = vadd.f32 0.0, %v1082
      %1084 = vmatmul.bf16.gmra.mxu0 %v1015
      %v1085 = vpop.f32.mrf.mxu0
      %v1086 = vadd.f32 0.0, %v1085
      %v1087 = vpop.f32.mrf.mxu0
      %v1088 = vadd.f32 0.0, %v1087
      %1089 = vmatmul.bf16.gmra.mxu0 %v1016
      %v1090 = vpop.f32.mrf.mxu0
      %v1091 = vadd.f32 0.0, %v1090
      %v1092 = vpop.f32.mrf.mxu0
      %v1093 = vadd.f32 0.0, %v1092
      %1094 = vmatmul.bf16.gmra.mxu0 %v1017
      %v1095 = vpop.f32.mrf.mxu0
      %v1096 = vadd.f32 0.0, %v1095
      %v1097 = vpop.f32.mrf.mxu0
      %v1098 = vadd.f32 0.0, %v1097
      %1099 = vmatmul.bf16.gmra.mxu0 %v1018
      %v1100 = vpop.f32.mrf.mxu0
      %v1101 = vadd.f32 0.0, %v1100
      %v1102 = vpop.f32.mrf.mxu0
      %v1103 = vadd.f32 0.0, %v1102
      %1104 = vmatmul.bf16.gmra.mxu0 %v1019
      %v1105 = vpop.f32.mrf.mxu0
      %v1106 = vadd.f32 0.0, %v1105
      %v1107 = vpop.f32.mrf.mxu0
      %v1108 = vadd.f32 0.0, %v1107
      %1109 = vmatmul.bf16.gmra.mxu0 %v1020
      %v1110 = vpop.f32.mrf.mxu0
      %v1111 = vadd.f32 0.0, %v1110
      %v1112 = vpop.f32.mrf.mxu0
      %v1113 = vadd.f32 0.0, %v1112
      %1114 = vmatmul.bf16.gmra.mxu0 %v1021
      %v1115 = vpop.f32.mrf.mxu0
      %v1116 = vadd.f32 0.0, %v1115
      %v1117 = vpop.f32.mrf.mxu0
      %v1118 = vadd.f32 0.0, %v1117
      %1119 = vdwg.mxu0
      %v1120 = vld [vmem:[#allocation15] sm:$0xff]
      %v1121 = vld [vmem:[#allocation15 + $0x8] sm:$0xff]
      %v1122 = vld [vmem:[#allocation15 + $0x10] sm:$0xff]
      %v1123 = vld [vmem:[#allocation15 + $0x18] sm:$0xff]
      %v1124 = vld [vmem:[#allocation15 + $0x20] sm:$0xff]
      %v1125 = vld [vmem:[#allocation15 + $0x28] sm:$0xff]
      %v1126 = vld [vmem:[#allocation15 + $0x30] sm:$0xff]
      %v1127 = vld [vmem:[#allocation15 + $0x38] sm:$0xff]
      %v1128 = vld [vmem:[#allocation15 + $0x40] sm:$0xff]
      %v1129 = vld [vmem:[#allocation15 + $0x48] sm:$0xff]
      %v1130 = vld [vmem:[#allocation15 + $0x50] sm:$0xff]
      %v1131 = vld [vmem:[#allocation15 + $0x58] sm:$0xff]
      %v1132 = vld [vmem:[#allocation15 + $0x60] sm:$0xff]
      %v1133 = vld [vmem:[#allocation15 + $0x68] sm:$0xff]
      %v1134 = vld [vmem:[#allocation15 + $0x70] sm:$0xff]
      %v1135 = vld [vmem:[#allocation15 + $0x78] sm:$0xff]
      %v1136 = vadd.f32 %v1120, %v1032
      %v1137 = vadd.f32 %v1121, %v1034
      %v1138 = vadd.f32 %v1122, %v1037
      %v1139 = vadd.f32 %v1123, %v1039
      %v1140 = vadd.f32 %v1124, %v1042
      %v1141 = vadd.f32 %v1125, %v1044
      %v1142 = vadd.f32 %v1126, %v1047
      %v1143 = vadd.f32 %v1127, %v1049
      %v1144 = vadd.f32 %v1128, %v1052
      %v1145 = vadd.f32 %v1129, %v1054
      %v1146 = vadd.f32 %v1130, %v1057
      %v1147 = vadd.f32 %v1131, %v1059
      %v1148 = vadd.f32 %v1132, %v1062
      %v1149 = vadd.f32 %v1133, %v1064
      %v1150 = vadd.f32 %v1134, %v1067
      %v1151 = vadd.f32 %v1135, %v1069
      %1152 = vst [vmem:[#allocation15] sm:$0xff] %v1136
      %1153 = vst [vmem:[#allocation15 + $0x8] sm:$0xff] %v1137
      %1154 = vst [vmem:[#allocation15 + $0x10] sm:$0xff] %v1138
      %1155 = vst [vmem:[#allocation15 + $0x18] sm:$0xff] %v1139
      %1156 = vst [vmem:[#allocation15 + $0x20] sm:$0xff] %v1140
      %1157 = vst [vmem:[#allocation15 + $0x28] sm:$0xff] %v1141
      %1158 = vst [vmem:[#allocation15 + $0x30] sm:$0xff] %v1142
      %1159 = vst [vmem:[#allocation15 + $0x38] sm:$0xff] %v1143
      %1160 = vst [vmem:[#allocation15 + $0x40] sm:$0xff] %v1144
      %1161 = vst [vmem:[#allocation15 + $0x48] sm:$0xff] %v1145
      %1162 = vst [vmem:[#allocation15 + $0x50] sm:$0xff] %v1146
      %1163 = vst [vmem:[#allocation15 + $0x58] sm:$0xff] %v1147
      %1164 = vst [vmem:[#allocation15 + $0x60] sm:$0xff] %v1148
      %1165 = vst [vmem:[#allocation15 + $0x68] sm:$0xff] %v1149
      %1166 = vst [vmem:[#allocation15 + $0x70] sm:$0xff] %v1150
      %1167 = vst [vmem:[#allocation15 + $0x78] sm:$0xff] %v1151
      %v1168 = vld [vmem:[#allocation17] sm:$0xff]
      %v1169 = vld [vmem:[#allocation17 + $0x8] sm:$0xff]
      %v1170 = vld [vmem:[#allocation17 + $0x10] sm:$0xff]
      %v1171 = vld [vmem:[#allocation17 + $0x18] sm:$0xff]
      %v1172 = vld [vmem:[#allocation17 + $0x20] sm:$0xff]
      %v1173 = vld [vmem:[#allocation17 + $0x28] sm:$0xff]
      %v1174 = vld [vmem:[#allocation17 + $0x30] sm:$0xff]
      %v1175 = vld [vmem:[#allocation17 + $0x38] sm:$0xff]
      %v1176 = vld [vmem:[#allocation17 + $0x40] sm:$0xff]
      %v1177 = vld [vmem:[#allocation17 + $0x48] sm:$0xff]
      %v1178 = vld [vmem:[#allocation17 + $0x50] sm:$0xff]
      %v1179 = vld [vmem:[#allocation17 + $0x58] sm:$0xff]
      %v1180 = vld [vmem:[#allocation17 + $0x60] sm:$0xff]
      %v1181 = vld [vmem:[#allocation17 + $0x68] sm:$0xff]
      %v1182 = vld [vmem:[#allocation17 + $0x70] sm:$0xff]
      %v1183 = vld [vmem:[#allocation17 + $0x78] sm:$0xff]
      %v1184 = vadd.f32 %v1168, %v1081
      %v1185 = vadd.f32 %v1169, %v1083
      %v1186 = vadd.f32 %v1170, %v1086
      %v1187 = vadd.f32 %v1171, %v1088
      %v1188 = vadd.f32 %v1172, %v1091
      %v1189 = vadd.f32 %v1173, %v1093
      %v1190 = vadd.f32 %v1174, %v1096
      %v1191 = vadd.f32 %v1175, %v1098
      %v1192 = vadd.f32 %v1176, %v1101
      %v1193 = vadd.f32 %v1177, %v1103
      %v1194 = vadd.f32 %v1178, %v1106
      %v1195 = vadd.f32 %v1179, %v1108
      %v1196 = vadd.f32 %v1180, %v1111
      %v1197 = vadd.f32 %v1181, %v1113
      %v1198 = vadd.f32 %v1182, %v1116
      %v1199 = vadd.f32 %v1183, %v1118
      %1200 = vst [vmem:[#allocation17] sm:$0xff] %v1184
      %1201 = vst [vmem:[#allocation17 + $0x8] sm:$0xff] %v1185
      %1202 = vst [vmem:[#allocation17 + $0x10] sm:$0xff] %v1186
      %1203 = vst [vmem:[#allocation17 + $0x18] sm:$0xff] %v1187
      %1204 = vst [vmem:[#allocation17 + $0x20] sm:$0xff] %v1188
      %1205 = vst [vmem:[#allocation17 + $0x28] sm:$0xff] %v1189
      %1206 = vst [vmem:[#allocation17 + $0x30] sm:$0xff] %v1190
      %1207 = vst [vmem:[#allocation17 + $0x38] sm:$0xff] %v1191
      %1208 = vst [vmem:[#allocation17 + $0x40] sm:$0xff] %v1192
      %1209 = vst [vmem:[#allocation17 + $0x48] sm:$0xff] %v1193
      %1210 = vst [vmem:[#allocation17 + $0x50] sm:$0xff] %v1194
      %1211 = vst [vmem:[#allocation17 + $0x58] sm:$0xff] %v1195
      %1212 = vst [vmem:[#allocation17 + $0x60] sm:$0xff] %v1196
      %1213 = vst [vmem:[#allocation17 + $0x68] sm:$0xff] %v1197
      %1214 = vst [vmem:[#allocation17 + $0x70] sm:$0xff] %v1198
      %1215 = vst [vmem:[#allocation17 + $0x78] sm:$0xff] %v1199
      %v1216 = vmul.f32 %v432, 0.7310586
      %v1217 = vmul.f32 %v433, 0.7310586
      %v1218 = vmul.f32 %v434, 0.7310586
      %v1219 = vmul.f32 %v435, 0.7310586
      %v1220 = vmul.f32 %v436, 0.7310586
      %v1221 = vmul.f32 %v437, 0.7310586
      %v1222 = vmul.f32 %v438, 0.7310586
      %v1223 = vmul.f32 %v439, 0.7310586
      %v1224 = vmul.f32 %v440, 0.7310586
      %v1225 = vmul.f32 %v441, 0.7310586
      %v1226 = vmul.f32 %v442, 0.7310586
      %v1227 = vmul.f32 %v443, 0.7310586
      %v1228 = vmul.f32 %v444, 0.7310586
      %v1229 = vmul.f32 %v445, 0.7310586
      %v1230 = vmul.f32 %v446, 0.7310586
      %v1231 = vmul.f32 %v447, 0.7310586
      %v1232 = vadd.f32 %v1216, 1.0
      %v1233 = vadd.f32 %v1217, 1.0
      %v1234 = vadd.f32 %v1218, 1.0
      %v1235 = vadd.f32 %v1219, 1.0
      %v1236 = vadd.f32 %v1220, 1.0
      %v1237 = vadd.f32 %v1221, 1.0
      %v1238 = vadd.f32 %v1222, 1.0
      %v1239 = vadd.f32 %v1223, 1.0
      %v1240 = vadd.f32 %v1224, 1.0
      %v1241 = vadd.f32 %v1225, 1.0
      %v1242 = vadd.f32 %v1226, 1.0
      %v1243 = vadd.f32 %v1227, 1.0
      %v1244 = vadd.f32 %v1228, 1.0
      %v1245 = vadd.f32 %v1229, 1.0
      %v1246 = vadd.f32 %v1230, 1.0
      %v1247 = vadd.f32 %v1231, 1.0
      %v1248 = vrcp.pop %v1232
      %v1249 = vrcp.pop %v1233
      %v1250 = vrcp.pop %v1234
      %v1251 = vrcp.pop %v1235
      %v1252 = vrcp.pop %v1236
      %v1253 = vrcp.pop %v1237
      %v1254 = vrcp.pop %v1238
      %v1255 = vrcp.pop %v1239
      %v1256 = vrcp.pop %v1240
      %v1257 = vrcp.pop %v1241
      %v1258 = vrcp.pop %v1242
      %v1259 = vrcp.pop %v1243
      %v1260 = vrcp.pop %v1244
      %v1261 = vrcp.pop %v1245
      %v1262 = vrcp.pop %v1246
      %v1263 = vrcp.pop %v1247
      %v1264 = vmul.f32 %v613, 0.7310586
      %v1265 = vmul.f32 %v614, 0.7310586
      %v1266 = vmul.f32 %v615, 0.7310586
      %v1267 = vmul.f32 %v616, 0.7310586
      %v1268 = vmul.f32 %v617, 0.7310586
      %v1269 = vmul.f32 %v618, 0.7310586
      %v1270 = vmul.f32 %v619, 0.7310586
      %v1271 = vmul.f32 %v620, 0.7310586
      %v1272 = vmul.f32 %v621, 0.7310586
      %v1273 = vmul.f32 %v622, 0.7310586
      %v1274 = vmul.f32 %v623, 0.7310586
      %v1275 = vmul.f32 %v624, 0.7310586
      %v1276 = vmul.f32 %v625, 0.7310586
      %v1277 = vmul.f32 %v626, 0.7310586
      %v1278 = vmul.f32 %v627, 0.7310586
      %v1279 = vmul.f32 %v628, 0.7310586
      %v1280 = vadd.f32 %v1264, 1.0
      %v1281 = vadd.f32 %v1265, 1.0
      %v1282 = vadd.f32 %v1266, 1.0
      %v1283 = vadd.f32 %v1267, 1.0
      %v1284 = vadd.f32 %v1268, 1.0
      %v1285 = vadd.f32 %v1269, 1.0
      %v1286 = vadd.f32 %v1270, 1.0
      %v1287 = vadd.f32 %v1271, 1.0
      %v1288 = vadd.f32 %v1272, 1.0
      %v1289 = vadd.f32 %v1273, 1.0
      %v1290 = vadd.f32 %v1274, 1.0
      %v1291 = vadd.f32 %v1275, 1.0
      %v1292 = vadd.f32 %v1276, 1.0
      %v1293 = vadd.f32 %v1277, 1.0
      %v1294 = vadd.f32 %v1278, 1.0
      %v1295 = vadd.f32 %v1279, 1.0
      %v1296 = vsub.f32 0.0, %v1280
      %v1297 = vsub.f32 0.0, %v1281
      %v1298 = vsub.f32 0.0, %v1282
      %v1299 = vsub.f32 0.0, %v1283
      %v1300 = vsub.f32 0.0, %v1284
      %v1301 = vsub.f32 0.0, %v1285
      %v1302 = vsub.f32 0.0, %v1286
      %v1303 = vsub.f32 0.0, %v1287
      %v1304 = vsub.f32 0.0, %v1288
      %v1305 = vsub.f32 0.0, %v1289
      %v1306 = vsub.f32 0.0, %v1290
      %v1307 = vsub.f32 0.0, %v1291
      %v1308 = vsub.f32 0.0, %v1292
      %v1309 = vsub.f32 0.0, %v1293
      %v1310 = vsub.f32 0.0, %v1294
      %v1311 = vsub.f32 0.0, %v1295
      %v1312 = vmul.f32 %v1296, %v1248
      %v1313 = vmul.f32 %v1297, %v1249
      %v1314 = vmul.f32 %v1298, %v1250
      %v1315 = vmul.f32 %v1299, %v1251
      %v1316 = vmul.f32 %v1300, %v1252
      %v1317 = vmul.f32 %v1301, %v1253
      %v1318 = vmul.f32 %v1302, %v1254
      %v1319 = vmul.f32 %v1303, %v1255
      %v1320 = vmul.f32 %v1304, %v1256
      %v1321 = vmul.f32 %v1305, %v1257
      %v1322 = vmul.f32 %v1306, %v1258
      %v1323 = vmul.f32 %v1307, %v1259
      %v1324 = vmul.f32 %v1308, %v1260
      %v1325 = vmul.f32 %v1309, %v1261
      %v1326 = vmul.f32 %v1310, %v1262
      %v1327 = vmul.f32 %v1311, %v1263
      %v1328 = vxor.u32 %v1312, 2147483648
      %v1329 = vxor.u32 %v1313, 2147483648
      %v1330 = vxor.u32 %v1314, 2147483648
      %v1331 = vxor.u32 %v1315, 2147483648
      %v1332 = vxor.u32 %v1316, 2147483648
      %v1333 = vxor.u32 %v1317, 2147483648
      %v1334 = vxor.u32 %v1318, 2147483648
      %v1335 = vxor.u32 %v1319, 2147483648
      %v1336 = vxor.u32 %v1320, 2147483648
      %v1337 = vxor.u32 %v1321, 2147483648
      %v1338 = vxor.u32 %v1322, 2147483648
      %v1339 = vxor.u32 %v1323, 2147483648
      %v1340 = vxor.u32 %v1324, 2147483648
      %v1341 = vxor.u32 %v1325, 2147483648
      %v1342 = vxor.u32 %v1326, 2147483648
      %v1343 = vxor.u32 %v1327, 2147483648
      %v1344 = vmul.f32 %v1328, 1.442695
      %v1345 = vpow.pop %v1344
      %v1346 = vmul.f32 %v1329, 1.442695
      %v1347 = vpow.pop %v1346
      %v1348 = vmul.f32 %v1330, 1.442695
      %v1349 = vpow.pop %v1348
      %v1350 = vmul.f32 %v1331, 1.442695
      %v1351 = vpow.pop %v1350
      %v1352 = vmul.f32 %v1332, 1.442695
      %v1353 = vpow.pop %v1352
      %v1354 = vmul.f32 %v1333, 1.442695
      %v1355 = vpow.pop %v1354
      %v1356 = vmul.f32 %v1334, 1.442695
      %v1357 = vpow.pop %v1356
      %v1358 = vmul.f32 %v1335, 1.442695
      %v1359 = vpow.pop %v1358
      %v1360 = vmul.f32 %v1336, 1.442695
      %v1361 = vpow.pop %v1360
      %v1362 = vmul.f32 %v1337, 1.442695
      %v1363 = vpow.pop %v1362
      %v1364 = vmul.f32 %v1338, 1.442695
      %v1365 = vpow.pop %v1364
      %v1366 = vmul.f32 %v1339, 1.442695
      %v1367 = vpow.pop %v1366
      %v1368 = vmul.f32 %v1340, 1.442695
      %v1369 = vpow.pop %v1368
      %v1370 = vmul.f32 %v1341, 1.442695
      %v1371 = vpow.pop %v1370
      %v1372 = vmul.f32 %v1342, 1.442695
      %v1373 = vpow.pop %v1372
      %v1374 = vmul.f32 %v1343, 1.442695
      %v1375 = vpow.pop %v1374
      %v1376 = vadd.f32 %v1345, 1.0
      %v1377 = vadd.f32 %v1347, 1.0
      %v1378 = vadd.f32 %v1349, 1.0
      %v1379 = vadd.f32 %v1351, 1.0
      %v1380 = vadd.f32 %v1353, 1.0
      %v1381 = vadd.f32 %v1355, 1.0
      %v1382 = vadd.f32 %v1357, 1.0
      %v1383 = vadd.f32 %v1359, 1.0
      %v1384 = vadd.f32 %v1361, 1.0
      %v1385 = vadd.f32 %v1363, 1.0
      %v1386 = vadd.f32 %v1365, 1.0
      %v1387 = vadd.f32 %v1367, 1.0
      %v1388 = vadd.f32 %v1369, 1.0
      %v1389 = vadd.f32 %v1371, 1.0
      %v1390 = vadd.f32 %v1373, 1.0
      %v1391 = vadd.f32 %v1375, 1.0
      %v1392 = vrcp.pop %v1376
      %v1393 = vmul.f32 %v1376, %v1392
      %v1394 = vsub.f32 1.0, %v1393
      %v1395 = vmul.f32 %v1392, %v1394
      %v1396 = vadd.f32 %v1392, %v1395
      %vm1397 = vweird.f32 %v1376
      %vm1398 = vweird.f32 %v1392
      %vm1399 = vmor %vm1397, %vm1398
      %v1400 = vsel %vm1399, %v1392, %v1396
      %v1401 = vand.u32 2147483647, %v1376
      %vm1402 = vcmp.eq.f32.partialorder %v1401, 8.507059e+37
      %v1403 = vand.u32 %v1376, 2147483648
      %v1404 = vor.u32 1.1754944e-38, %v1403
      %v1405 = vsel %vm1402, %v1404, %v1400
      %v1406 = vmul.f32 1.0, %v1405
      %v1407 = vrcp.pop %v1377
      %v1408 = vmul.f32 %v1377, %v1407
      %v1409 = vsub.f32 1.0, %v1408
      %v1410 = vmul.f32 %v1407, %v1409
      %v1411 = vadd.f32 %v1407, %v1410
      %vm1412 = vweird.f32 %v1377
      %vm1413 = vweird.f32 %v1407
      %vm1414 = vmor %vm1412, %vm1413
      %v1415 = vsel %vm1414, %v1407, %v1411
      %v1416 = vand.u32 2147483647, %v1377
      %vm1417 = vcmp.eq.f32.partialorder %v1416, 8.507059e+37
      %v1418 = vand.u32 %v1377, 2147483648
      %v1419 = vor.u32 1.1754944e-38, %v1418
      %v1420 = vsel %vm1417, %v1419, %v1415
      %v1421 = vmul.f32 1.0, %v1420
      %v1422 = vrcp.pop %v1378
      %v1423 = vmul.f32 %v1378, %v1422
      %v1424 = vsub.f32 1.0, %v1423
      %v1425 = vmul.f32 %v1422, %v1424
      %v1426 = vadd.f32 %v1422, %v1425
      %vm1427 = vweird.f32 %v1378
      %vm1428 = vweird.f32 %v1422
      %vm1429 = vmor %vm1427, %vm1428
      %v1430 = vsel %vm1429, %v1422, %v1426
      %v1431 = vand.u32 2147483647, %v1378
      %vm1432 = vcmp.eq.f32.partialorder %v1431, 8.507059e+37
      %v1433 = vand.u32 %v1378, 2147483648
      %v1434 = vor.u32 1.1754944e-38, %v1433
      %v1435 = vsel %vm1432, %v1434, %v1430
      %v1436 = vmul.f32 1.0, %v1435
      %v1437 = vrcp.pop %v1379
      %v1438 = vmul.f32 %v1379, %v1437
      %v1439 = vsub.f32 1.0, %v1438
      %v1440 = vmul.f32 %v1437, %v1439
      %v1441 = vadd.f32 %v1437, %v1440
      %vm1442 = vweird.f32 %v1379
      %vm1443 = vweird.f32 %v1437
      %vm1444 = vmor %vm1442, %vm1443
      %v1445 = vsel %vm1444, %v1437, %v1441
      %v1446 = vand.u32 2147483647, %v1379
      %vm1447 = vcmp.eq.f32.partialorder %v1446, 8.507059e+37
      %v1448 = vand.u32 %v1379, 2147483648
      %v1449 = vor.u32 1.1754944e-38, %v1448
      %v1450 = vsel %vm1447, %v1449, %v1445
      %v1451 = vmul.f32 1.0, %v1450
      %v1452 = vrcp.pop %v1380
      %v1453 = vmul.f32 %v1380, %v1452
      %v1454 = vsub.f32 1.0, %v1453
      %v1455 = vmul.f32 %v1452, %v1454
      %v1456 = vadd.f32 %v1452, %v1455
      %vm1457 = vweird.f32 %v1380
      %vm1458 = vweird.f32 %v1452
      %vm1459 = vmor %vm1457, %vm1458
      %v1460 = vsel %vm1459, %v1452, %v1456
      %v1461 = vand.u32 2147483647, %v1380
      %vm1462 = vcmp.eq.f32.partialorder %v1461, 8.507059e+37
      %v1463 = vand.u32 %v1380, 2147483648
      %v1464 = vor.u32 1.1754944e-38, %v1463
      %v1465 = vsel %vm1462, %v1464, %v1460
      %v1466 = vmul.f32 1.0, %v1465
      %v1467 = vrcp.pop %v1381
      %v1468 = vmul.f32 %v1381, %v1467
      %v1469 = vsub.f32 1.0, %v1468
      %v1470 = vmul.f32 %v1467, %v1469
      %v1471 = vadd.f32 %v1467, %v1470
      %vm1472 = vweird.f32 %v1381
      %vm1473 = vweird.f32 %v1467
      %vm1474 = vmor %vm1472, %vm1473
      %v1475 = vsel %vm1474, %v1467, %v1471
      %v1476 = vand.u32 2147483647, %v1381
      %vm1477 = vcmp.eq.f32.partialorder %v1476, 8.507059e+37
      %v1478 = vand.u32 %v1381, 2147483648
      %v1479 = vor.u32 1.1754944e-38, %v1478
      %v1480 = vsel %vm1477, %v1479, %v1475
      %v1481 = vmul.f32 1.0, %v1480
      %v1482 = vrcp.pop %v1382
      %v1483 = vmul.f32 %v1382, %v1482
      %v1484 = vsub.f32 1.0, %v1483
      %v1485 = vmul.f32 %v1482, %v1484
      %v1486 = vadd.f32 %v1482, %v1485
      %vm1487 = vweird.f32 %v1382
      %vm1488 = vweird.f32 %v1482
      %vm1489 = vmor %vm1487, %vm1488
      %v1490 = vsel %vm1489, %v1482, %v1486
      %v1491 = vand.u32 2147483647, %v1382
      %vm1492 = vcmp.eq.f32.partialorder %v1491, 8.507059e+37
      %v1493 = vand.u32 %v1382, 2147483648
      %v1494 = vor.u32 1.1754944e-38, %v1493
      %v1495 = vsel %vm1492, %v1494, %v1490
      %v1496 = vmul.f32 1.0, %v1495
      %v1497 = vrcp.pop %v1383
      %v1498 = vmul.f32 %v1383, %v1497
      %v1499 = vsub.f32 1.0, %v1498
      %v1500 = vmul.f32 %v1497, %v1499
      %v1501 = vadd.f32 %v1497, %v1500
      %vm1502 = vweird.f32 %v1383
      %vm1503 = vweird.f32 %v1497
      %vm1504 = vmor %vm1502, %vm1503
      %v1505 = vsel %vm1504, %v1497, %v1501
      %v1506 = vand.u32 2147483647, %v1383
      %vm1507 = vcmp.eq.f32.partialorder %v1506, 8.507059e+37
      %v1508 = vand.u32 %v1383, 2147483648
      %v1509 = vor.u32 1.1754944e-38, %v1508
      %v1510 = vsel %vm1507, %v1509, %v1505
      %v1511 = vmul.f32 1.0, %v1510
      %v1512 = vrcp.pop %v1384
      %v1513 = vmul.f32 %v1384, %v1512
      %v1514 = vsub.f32 1.0, %v1513
      %v1515 = vmul.f32 %v1512, %v1514
      %v1516 = vadd.f32 %v1512, %v1515
      %vm1517 = vweird.f32 %v1384
      %vm1518 = vweird.f32 %v1512
      %vm1519 = vmor %vm1517, %vm1518
      %v1520 = vsel %vm1519, %v1512, %v1516
      %v1521 = vand.u32 2147483647, %v1384
      %vm1522 = vcmp.eq.f32.partialorder %v1521, 8.507059e+37
      %v1523 = vand.u32 %v1384, 2147483648
      %v1524 = vor.u32 1.1754944e-38, %v1523
      %v1525 = vsel %vm1522, %v1524, %v1520
      %v1526 = vmul.f32 1.0, %v1525
      %v1527 = vrcp.pop %v1385
      %v1528 = vmul.f32 %v1385, %v1527
      %v1529 = vsub.f32 1.0, %v1528
      %v1530 = vmul.f32 %v1527, %v1529
      %v1531 = vadd.f32 %v1527, %v1530
      %vm1532 = vweird.f32 %v1385
      %vm1533 = vweird.f32 %v1527
      %vm1534 = vmor %vm1532, %vm1533
      %v1535 = vsel %vm1534, %v1527, %v1531
      %v1536 = vand.u32 2147483647, %v1385
      %vm1537 = vcmp.eq.f32.partialorder %v1536, 8.507059e+37
      %v1538 = vand.u32 %v1385, 2147483648
      %v1539 = vor.u32 1.1754944e-38, %v1538
      %v1540 = vsel %vm1537, %v1539, %v1535
      %v1541 = vmul.f32 1.0, %v1540
      %v1542 = vrcp.pop %v1386
      %v1543 = vmul.f32 %v1386, %v1542
      %v1544 = vsub.f32 1.0, %v1543
      %v1545 = vmul.f32 %v1542, %v1544
      %v1546 = vadd.f32 %v1542, %v1545
      %vm1547 = vweird.f32 %v1386
      %vm1548 = vweird.f32 %v1542
      %vm1549 = vmor %vm1547, %vm1548
      %v1550 = vsel %vm1549, %v1542, %v1546
      %v1551 = vand.u32 2147483647, %v1386
      %vm1552 = vcmp.eq.f32.partialorder %v1551, 8.507059e+37
      %v1553 = vand.u32 %v1386, 2147483648
      %v1554 = vor.u32 1.1754944e-38, %v1553
      %v1555 = vsel %vm1552, %v1554, %v1550
      %v1556 = vmul.f32 1.0, %v1555
      %v1557 = vrcp.pop %v1387
      %v1558 = vmul.f32 %v1387, %v1557
      %v1559 = vsub.f32 1.0, %v1558
      %v1560 = vmul.f32 %v1557, %v1559
      %v1561 = vadd.f32 %v1557, %v1560
      %vm1562 = vweird.f32 %v1387
      %vm1563 = vweird.f32 %v1557
      %vm1564 = vmor %vm1562, %vm1563
      %v1565 = vsel %vm1564, %v1557, %v1561
      %v1566 = vand.u32 2147483647, %v1387
      %vm1567 = vcmp.eq.f32.partialorder %v1566, 8.507059e+37
      %v1568 = vand.u32 %v1387, 2147483648
      %v1569 = vor.u32 1.1754944e-38, %v1568
      %v1570 = vsel %vm1567, %v1569, %v1565
      %v1571 = vmul.f32 1.0, %v1570
      %v1572 = vrcp.pop %v1388
      %v1573 = vmul.f32 %v1388, %v1572
      %v1574 = vsub.f32 1.0, %v1573
      %v1575 = vmul.f32 %v1572, %v1574
      %v1576 = vadd.f32 %v1572, %v1575
      %vm1577 = vweird.f32 %v1388
      %vm1578 = vweird.f32 %v1572
      %vm1579 = vmor %vm1577, %vm1578
      %v1580 = vsel %vm1579, %v1572, %v1576
      %v1581 = vand.u32 2147483647, %v1388
      %vm1582 = vcmp.eq.f32.partialorder %v1581, 8.507059e+37
      %v1583 = vand.u32 %v1388, 2147483648
      %v1584 = vor.u32 1.1754944e-38, %v1583
      %v1585 = vsel %vm1582, %v1584, %v1580
      %v1586 = vmul.f32 1.0, %v1585
      %v1587 = vrcp.pop %v1389
      %v1588 = vmul.f32 %v1389, %v1587
      %v1589 = vsub.f32 1.0, %v1588
      %v1590 = vmul.f32 %v1587, %v1589
      %v1591 = vadd.f32 %v1587, %v1590
      %vm1592 = vweird.f32 %v1389
      %vm1593 = vweird.f32 %v1587
      %vm1594 = vmor %vm1592, %vm1593
      %v1595 = vsel %vm1594, %v1587, %v1591
      %v1596 = vand.u32 2147483647, %v1389
      %vm1597 = vcmp.eq.f32.partialorder %v1596, 8.507059e+37
      %v1598 = vand.u32 %v1389, 2147483648
      %v1599 = vor.u32 1.1754944e-38, %v1598
      %v1600 = vsel %vm1597, %v1599, %v1595
      %v1601 = vmul.f32 1.0, %v1600
      %v1602 = vrcp.pop %v1390
      %v1603 = vmul.f32 %v1390, %v1602
      %v1604 = vsub.f32 1.0, %v1603
      %v1605 = vmul.f32 %v1602, %v1604
      %v1606 = vadd.f32 %v1602, %v1605
      %vm1607 = vweird.f32 %v1390
      %vm1608 = vweird.f32 %v1602
      %vm1609 = vmor %vm1607, %vm1608
      %v1610 = vsel %vm1609, %v1602, %v1606
      %v1611 = vand.u32 2147483647, %v1390
      %vm1612 = vcmp.eq.f32.partialorder %v1611, 8.507059e+37
      %v1613 = vand.u32 %v1390, 2147483648
      %v1614 = vor.u32 1.1754944e-38, %v1613
      %v1615 = vsel %vm1612, %v1614, %v1610
      %v1616 = vmul.f32 1.0, %v1615
      %v1617 = vrcp.pop %v1391
      %v1618 = vmul.f32 %v1391, %v1617
      %v1619 = vsub.f32 1.0, %v1618
      %v1620 = vmul.f32 %v1617, %v1619
      %v1621 = vadd.f32 %v1617, %v1620
      %vm1622 = vweird.f32 %v1391
      %vm1623 = vweird.f32 %v1617
      %vm1624 = vmor %vm1622, %vm1623
      %v1625 = vsel %vm1624, %v1617, %v1621
      %v1626 = vand.u32 2147483647, %v1391
      %vm1627 = vcmp.eq.f32.partialorder %v1626, 8.507059e+37
      %v1628 = vand.u32 %v1391, 2147483648
      %v1629 = vor.u32 1.1754944e-38, %v1628
      %v1630 = vsel %vm1627, %v1629, %v1625
      %v1631 = vmul.f32 1.0, %v1630
      %v1632 = vld [vmem:[#allocation3] sm:$0xff]
      %v1633 = vld [vmem:[#allocation3 + $0x8] sm:$0xff]
      %v1634 = vld [vmem:[#allocation3 + $0x10] sm:$0xff]
      %v1635 = vld [vmem:[#allocation3 + $0x18] sm:$0xff]
      %v1636 = vld [vmem:[#allocation3 + $0x20] sm:$0xff]
      %v1637 = vld [vmem:[#allocation3 + $0x28] sm:$0xff]
      %v1638 = vld [vmem:[#allocation3 + $0x30] sm:$0xff]
      %v1639 = vld [vmem:[#allocation3 + $0x38] sm:$0xff]
      %v1640 = vld [vmem:[#allocation3 + $0x40] sm:$0xff]
      %v1641 = vld [vmem:[#allocation3 + $0x48] sm:$0xff]
      %v1642 = vld [vmem:[#allocation3 + $0x50] sm:$0xff]
      %v1643 = vld [vmem:[#allocation3 + $0x58] sm:$0xff]
      %v1644 = vld [vmem:[#allocation3 + $0x60] sm:$0xff]
      %v1645 = vld [vmem:[#allocation3 + $0x68] sm:$0xff]
      %v1646 = vld [vmem:[#allocation3 + $0x70] sm:$0xff]
      %v1647 = vld [vmem:[#allocation3 + $0x78] sm:$0xff]
      %1648 = vxpose.xlu0.b32.start [1/16] %v1406, 128
      %1649 = vxpose.xlu0.b32.cont [2/16] %v1421, 128
      %1650 = vxpose.xlu0.b32.cont [3/16] %v1436, 128
      %1651 = vxpose.xlu0.b32.cont [4/16] %v1451, 128
      %1652 = vxpose.xlu0.b32.cont [5/16] %v1466, 128
      %1653 = vxpose.xlu0.b32.cont [6/16] %v1481, 128
      %1654 = vxpose.xlu0.b32.cont [7/16] %v1496, 128
      %1655 = vxpose.xlu0.b32.cont [8/16] %v1511, 128
      %1656 = vxpose.xlu0.b32.cont [9/16] %v1526, 128
      %1657 = vxpose.xlu0.b32.cont [10/16] %v1541, 128
      %1658 = vxpose.xlu0.b32.cont [11/16] %v1556, 128
      %1659 = vxpose.xlu0.b32.cont [12/16] %v1571, 128
      %1660 = vxpose.xlu0.b32.cont [13/16] %v1586, 128
      %1661 = vxpose.xlu0.b32.cont [14/16] %v1601, 128
      %1662 = vxpose.xlu0.b32.cont [15/16] %v1616, 128
      %1663 = vxpose.xlu0.b32.end [16/16] %v1631, 128
      %v1664 = vpop.trf.xlu0
      %v1665 = vpop.trf.xlu0
      %v1666 = vpop.trf.xlu0
      %v1667 = vpop.trf.xlu0
      %v1668 = vpop.trf.xlu0
      %v1669 = vpop.trf.xlu0
      %v1670 = vpop.trf.xlu0
      %v1671 = vpop.trf.xlu0
      %v1672 = vpop.trf.xlu0
      %v1673 = vpop.trf.xlu0
      %v1674 = vpop.trf.xlu0
      %v1675 = vpop.trf.xlu0
      %v1676 = vpop.trf.xlu0
      %v1677 = vpop.trf.xlu0
      %v1678 = vpop.trf.xlu0
      %v1679 = vpop.trf.xlu0
      %1680 = vmatpush.msra.mxu0 %v1647
      %1681 = vmatpush.msra.mxu0 %v1646
      %1682 = vmatpush.msra.mxu0 %v1645
      %1683 = vmatpush.msra.mxu0 %v1644
      %1684 = vmatpush.msra.mxu0 %v1643
      %1685 = vmatpush.msra.mxu0 %v1642
      %1686 = vmatpush.msra.mxu0 %v1641
      %1687 = vmatpush.msra.mxu0 %v1640
      %1688 = vmatpush.msra.mxu0 %v1639
      %1689 = vmatpush.msra.mxu0 %v1638
      %1690 = vmatpush.msra.mxu0 %v1637
      %1691 = vmatpush.msra.mxu0 %v1636
      %1692 = vmatpush.msra.mxu0 %v1635
      %1693 = vmatpush.msra.mxu0 %v1634
      %1694 = vmatpush.msra.mxu0 %v1633
      %1695 = vmatpush.msra.mxu0 %v1632
      %1696 = vmatmul.f32.gmra.mxu0 %v1664
      %v1697 = vpop.f32.mrf.mxu0
      %v1698 = vadd.f32 0.0, %v1697
      %1699 = vmatmul.f32.gmra.mxu0 %v1665
      %v1700 = vpop.f32.mrf.mxu0
      %v1701 = vadd.f32 0.0, %v1700
      %1702 = vmatmul.f32.gmra.mxu0 %v1666
      %v1703 = vpop.f32.mrf.mxu0
      %v1704 = vadd.f32 0.0, %v1703
      %1705 = vmatmul.f32.gmra.mxu0 %v1667
      %v1706 = vpop.f32.mrf.mxu0
      %v1707 = vadd.f32 0.0, %v1706
      %1708 = vmatmul.f32.gmra.mxu0 %v1668
      %v1709 = vpop.f32.mrf.mxu0
      %v1710 = vadd.f32 0.0, %v1709
      %1711 = vmatmul.f32.gmra.mxu0 %v1669
      %v1712 = vpop.f32.mrf.mxu0
      %v1713 = vadd.f32 0.0, %v1712
      %1714 = vmatmul.f32.gmra.mxu0 %v1670
      %v1715 = vpop.f32.mrf.mxu0
      %v1716 = vadd.f32 0.0, %v1715
      %1717 = vmatmul.f32.gmra.mxu0 %v1671
      %v1718 = vpop.f32.mrf.mxu0
      %v1719 = vadd.f32 0.0, %v1718
      %1720 = vmatmul.f32.gmra.mxu0 %v1672
      %v1721 = vpop.f32.mrf.mxu0
      %v1722 = vadd.f32 0.0, %v1721
      %1723 = vmatmul.f32.gmra.mxu0 %v1673
      %v1724 = vpop.f32.mrf.mxu0
      %v1725 = vadd.f32 0.0, %v1724
      %1726 = vmatmul.f32.gmra.mxu0 %v1674
      %v1727 = vpop.f32.mrf.mxu0
      %v1728 = vadd.f32 0.0, %v1727
      %1729 = vmatmul.f32.gmra.mxu0 %v1675
      %v1730 = vpop.f32.mrf.mxu0
      %v1731 = vadd.f32 0.0, %v1730
      %1732 = vmatmul.f32.gmra.mxu0 %v1676
      %v1733 = vpop.f32.mrf.mxu0
      %v1734 = vadd.f32 0.0, %v1733
      %1735 = vmatmul.f32.gmra.mxu0 %v1677
      %v1736 = vpop.f32.mrf.mxu0
      %v1737 = vadd.f32 0.0, %v1736
      %1738 = vmatmul.f32.gmra.mxu0 %v1678
      %v1739 = vpop.f32.mrf.mxu0
      %v1740 = vadd.f32 0.0, %v1739
      %1741 = vmatmul.f32.gmra.mxu0 %v1679
      %v1742 = vpop.f32.mrf.mxu0
      %v1743 = vadd.f32 0.0, %v1742
      %1744 = vdwg.mxu0
      %v1745 = vld [vmem:[#allocation8] sm:$0xff]
      %v1746 = vld [vmem:[#allocation8 + $0x8] sm:$0xff]
      %v1747 = vld [vmem:[#allocation8 + $0x10] sm:$0xff]
      %v1748 = vld [vmem:[#allocation8 + $0x18] sm:$0xff]
      %v1749 = vld [vmem:[#allocation8 + $0x20] sm:$0xff]
      %v1750 = vld [vmem:[#allocation8 + $0x28] sm:$0xff]
      %v1751 = vld [vmem:[#allocation8 + $0x30] sm:$0xff]
      %v1752 = vld [vmem:[#allocation8 + $0x38] sm:$0xff]
      %v1753 = vld [vmem:[#allocation8 + $0x40] sm:$0xff]
      %v1754 = vld [vmem:[#allocation8 + $0x48] sm:$0xff]
      %v1755 = vld [vmem:[#allocation8 + $0x50] sm:$0xff]
      %v1756 = vld [vmem:[#allocation8 + $0x58] sm:$0xff]
      %v1757 = vld [vmem:[#allocation8 + $0x60] sm:$0xff]
      %v1758 = vld [vmem:[#allocation8 + $0x68] sm:$0xff]
      %v1759 = vld [vmem:[#allocation8 + $0x70] sm:$0xff]
      %v1760 = vld [vmem:[#allocation8 + $0x78] sm:$0xff]
      %v1761 = vmul.f32 %v1698, %v1745
      %v1762 = vmul.f32 %v1701, %v1746
      %v1763 = vmul.f32 %v1704, %v1747
      %v1764 = vmul.f32 %v1707, %v1748
      %v1765 = vmul.f32 %v1710, %v1749
      %v1766 = vmul.f32 %v1713, %v1750
      %v1767 = vmul.f32 %v1716, %v1751
      %v1768 = vmul.f32 %v1719, %v1752
      %v1769 = vmul.f32 %v1722, %v1753
      %v1770 = vmul.f32 %v1725, %v1754
      %v1771 = vmul.f32 %v1728, %v1755
      %v1772 = vmul.f32 %v1731, %v1756
      %v1773 = vmul.f32 %v1734, %v1757
      %v1774 = vmul.f32 %v1737, %v1758
      %v1775 = vmul.f32 %v1740, %v1759
      %v1776 = vmul.f32 %v1743, %v1760
      %v1777 = vld [vmem:[#allocation14] sm:$0xff]
      %v1778 = vld [vmem:[#allocation14 + $0x8] sm:$0xff]
      %v1779 = vld [vmem:[#allocation14 + $0x10] sm:$0xff]
      %v1780 = vld [vmem:[#allocation14 + $0x18] sm:$0xff]
      %v1781 = vld [vmem:[#allocation14 + $0x20] sm:$0xff]
      %v1782 = vld [vmem:[#allocation14 + $0x28] sm:$0xff]
      %v1783 = vld [vmem:[#allocation14 + $0x30] sm:$0xff]
      %v1784 = vld [vmem:[#allocation14 + $0x38] sm:$0xff]
      %v1785 = vld [vmem:[#allocation14 + $0x40] sm:$0xff]
      %v1786 = vld [vmem:[#allocation14 + $0x48] sm:$0xff]
      %v1787 = vld [vmem:[#allocation14 + $0x50] sm:$0xff]
      %v1788 = vld [vmem:[#allocation14 + $0x58] sm:$0xff]
      %v1789 = vld [vmem:[#allocation14 + $0x60] sm:$0xff]
      %v1790 = vld [vmem:[#allocation14 + $0x68] sm:$0xff]
      %v1791 = vld [vmem:[#allocation14 + $0x70] sm:$0xff]
      %v1792 = vld [vmem:[#allocation14 + $0x78] sm:$0xff]
      %1793 = vxpose.xlu0.b32.start [1/16] %v1761, 128
      %1794 = vxpose.xlu0.b32.cont [2/16] %v1762, 128
      %1795 = vxpose.xlu0.b32.cont [3/16] %v1763, 128
      %1796 = vxpose.xlu0.b32.cont [4/16] %v1764, 128
      %1797 = vxpose.xlu0.b32.cont [5/16] %v1765, 128
      %1798 = vxpose.xlu0.b32.cont [6/16] %v1766, 128
      %1799 = vxpose.xlu0.b32.cont [7/16] %v1767, 128
      %1800 = vxpose.xlu0.b32.cont [8/16] %v1768, 128
      %1801 = vxpose.xlu0.b32.cont [9/16] %v1769, 128
      %1802 = vxpose.xlu0.b32.cont [10/16] %v1770, 128
      %1803 = vxpose.xlu0.b32.cont [11/16] %v1771, 128
      %1804 = vxpose.xlu0.b32.cont [12/16] %v1772, 128
      %1805 = vxpose.xlu0.b32.cont [13/16] %v1773, 128
      %1806 = vxpose.xlu0.b32.cont [14/16] %v1774, 128
      %1807 = vxpose.xlu0.b32.cont [15/16] %v1775, 128
      %1808 = vxpose.xlu0.b32.end [16/16] %v1776, 128
      %v1809 = vpop.trf.xlu0
      %v1810 = vpop.trf.xlu0
      %v1811 = vpop.trf.xlu0
      %v1812 = vpop.trf.xlu0
      %v1813 = vpop.trf.xlu0
      %v1814 = vpop.trf.xlu0
      %v1815 = vpop.trf.xlu0
      %v1816 = vpop.trf.xlu0
      %v1817 = vpop.trf.xlu0
      %v1818 = vpop.trf.xlu0
      %v1819 = vpop.trf.xlu0
      %v1820 = vpop.trf.xlu0
      %v1821 = vpop.trf.xlu0
      %v1822 = vpop.trf.xlu0
      %v1823 = vpop.trf.xlu0
      %v1824 = vpop.trf.xlu0
      %1825 = vmatpush.msra.mxu0 %v660
      %1826 = vmatpush.msra.mxu0 %v659
      %1827 = vmatpush.msra.mxu0 %v658
      %1828 = vmatpush.msra.mxu0 %v657
      %1829 = vmatpush.msra.mxu0 %v656
      %1830 = vmatpush.msra.mxu0 %v655
      %1831 = vmatpush.msra.mxu0 %v654
      %1832 = vmatpush.msra.mxu0 %v653
      %1833 = vmatpush.msra.mxu0 %v652
      %1834 = vmatpush.msra.mxu0 %v651
      %1835 = vmatpush.msra.mxu0 %v650
      %1836 = vmatpush.msra.mxu0 %v649
      %1837 = vmatpush.msra.mxu0 %v648
      %1838 = vmatpush.msra.mxu0 %v647
      %1839 = vmatpush.msra.mxu0 %v646
      %1840 = vmatpush.msra.mxu0 %v645
      %1841 = vmatmul.f32.gmra.mxu0 %v1809
      %v1842 = vpop.f32.mrf.mxu0
      %v1843 = vadd.f32 0.0, %v1842
      %1844 = vmatmul.f32.gmra.mxu0 %v1810
      %v1845 = vpop.f32.mrf.mxu0
      %v1846 = vadd.f32 0.0, %v1845
      %1847 = vmatmul.f32.gmra.mxu0 %v1811
      %v1848 = vpop.f32.mrf.mxu0
      %v1849 = vadd.f32 0.0, %v1848
      %1850 = vmatmul.f32.gmra.mxu0 %v1812
      %v1851 = vpop.f32.mrf.mxu0
      %v1852 = vadd.f32 0.0, %v1851
      %1853 = vmatmul.f32.gmra.mxu0 %v1813
      %v1854 = vpop.f32.mrf.mxu0
      %v1855 = vadd.f32 0.0, %v1854
      %1856 = vmatmul.f32.gmra.mxu0 %v1814
      %v1857 = vpop.f32.mrf.mxu0
      %v1858 = vadd.f32 0.0, %v1857
      %1859 = vmatmul.f32.gmra.mxu0 %v1815
      %v1860 = vpop.f32.mrf.mxu0
      %v1861 = vadd.f32 0.0, %v1860
      %1862 = vmatmul.f32.gmra.mxu0 %v1816
      %v1863 = vpop.f32.mrf.mxu0
      %v1864 = vadd.f32 0.0, %v1863
      %1865 = vmatmul.f32.gmra.mxu0 %v1817
      %v1866 = vpop.f32.mrf.mxu0
      %v1867 = vadd.f32 0.0, %v1866
      %1868 = vmatmul.f32.gmra.mxu0 %v1818
      %v1869 = vpop.f32.mrf.mxu0
      %v1870 = vadd.f32 0.0, %v1869
      %1871 = vmatmul.f32.gmra.mxu0 %v1819
      %v1872 = vpop.f32.mrf.mxu0
      %v1873 = vadd.f32 0.0, %v1872
      %1874 = vmatmul.f32.gmra.mxu0 %v1820
      %v1875 = vpop.f32.mrf.mxu0
      %v1876 = vadd.f32 0.0, %v1875
      %1877 = vmatmul.f32.gmra.mxu0 %v1821
      %v1878 = vpop.f32.mrf.mxu0
      %v1879 = vadd.f32 0.0, %v1878
      %1880 = vmatmul.f32.gmra.mxu0 %v1822
      %v1881 = vpop.f32.mrf.mxu0
      %v1882 = vadd.f32 0.0, %v1881
      %1883 = vmatmul.f32.gmra.mxu0 %v1823
      %v1884 = vpop.f32.mrf.mxu0
      %v1885 = vadd.f32 0.0, %v1884
      %1886 = vmatmul.f32.gmra.mxu0 %v1824
      %v1887 = vpop.f32.mrf.mxu0
      %v1888 = vadd.f32 0.0, %v1887
      %1889 = vdwg.mxu0
      %v1890 = vadd.f32 %v1777, %v1843
      %v1891 = vadd.f32 %v1778, %v1846
      %v1892 = vadd.f32 %v1779, %v1849
      %v1893 = vadd.f32 %v1780, %v1852
      %v1894 = vadd.f32 %v1781, %v1855
      %v1895 = vadd.f32 %v1782, %v1858
      %v1896 = vadd.f32 %v1783, %v1861
      %v1897 = vadd.f32 %v1784, %v1864
      %v1898 = vadd.f32 %v1785, %v1867
      %v1899 = vadd.f32 %v1786, %v1870
      %v1900 = vadd.f32 %v1787, %v1873
      %v1901 = vadd.f32 %v1788, %v1876
      %v1902 = vadd.f32 %v1789, %v1879
      %v1903 = vadd.f32 %v1790, %v1882
      %v1904 = vadd.f32 %v1791, %v1885
      %v1905 = vadd.f32 %v1792, %v1888
      %1906 = vst [vmem:[#allocation14] sm:$0xff] %v1890
      %1907 = vst [vmem:[#allocation14 + $0x8] sm:$0xff] %v1891
      %1908 = vst [vmem:[#allocation14 + $0x10] sm:$0xff] %v1892
      %1909 = vst [vmem:[#allocation14 + $0x18] sm:$0xff] %v1893
      %1910 = vst [vmem:[#allocation14 + $0x20] sm:$0xff] %v1894
      %1911 = vst [vmem:[#allocation14 + $0x28] sm:$0xff] %v1895
      %1912 = vst [vmem:[#allocation14 + $0x30] sm:$0xff] %v1896
      %1913 = vst [vmem:[#allocation14 + $0x38] sm:$0xff] %v1897
      %1914 = vst [vmem:[#allocation14 + $0x40] sm:$0xff] %v1898
      %1915 = vst [vmem:[#allocation14 + $0x48] sm:$0xff] %v1899
      %1916 = vst [vmem:[#allocation14 + $0x50] sm:$0xff] %v1900
      %1917 = vst [vmem:[#allocation14 + $0x58] sm:$0xff] %v1901
      %1918 = vst [vmem:[#allocation14 + $0x60] sm:$0xff] %v1902
      %1919 = vst [vmem:[#allocation14 + $0x68] sm:$0xff] %v1903
      %1920 = vst [vmem:[#allocation14 + $0x70] sm:$0xff] %v1904
      %1921 = vst [vmem:[#allocation14 + $0x78] sm:$0xff] %v1905
    $region73: #{tpu_custom_call.1} parent=1 // pred_fallthru
      _
    // Predicated region
    $region74: #{tpu_custom_call.1} parent=1 // pred_check
      _
    $region75: #{tpu_custom_call.1} parent=1 // pred_check_branch
      %1923 = sbr.rel (0) target = $region77
    $region76: #{tpu_custom_call.1} parent=1 // pred_region
      %1925 = vsyncadd [#allocation5], 0
      %s1926 = sshll.u32 [#allocation14], 4
      %s1927 = int_to_ptr.vmem [resolvable:$true] %s1926
      %s1928 = sshll.u32 %s9, 4
      %s1929 = int_to_ptr.hbm [resolvable:$true] %s1928
      %1934 = dma.vmem_to_hbm [thread:$0]  %s1927, 2048, %s1929, [#allocation5], 128, 128, 8
    $region77: #{tpu_custom_call.1} parent=1 // pred_fallthru
      _
    // Predicated region
    $region78: #{tpu_custom_call.1} parent=1 // pred_check
      _
    $region79: #{tpu_custom_call.1} parent=1 // pred_check_branch
      %1936 = sbr.rel (0) target = $region81
    $region80: #{tpu_custom_call.1} parent=1 // pred_region
      %1938 = vsyncadd [#allocation16], 0
      %s1939 = sshll.u32 [#allocation15], 4
      %s1940 = int_to_ptr.vmem [resolvable:$true] %s1939
      %s1941 = sshll.u32 %s10, 4
      %s1942 = int_to_ptr.hbm [resolvable:$true] %s1941
      %1947 = dma.vmem_to_hbm [thread:$0]  %s1940, 2048, %s1942, [#allocation16], 128, 128, 8
    $region81: #{tpu_custom_call.1} parent=1 // pred_fallthru
      _
    // Predicated region
    $region82: #{tpu_custom_call.1} parent=1 // pred_check
      _
    $region83: #{tpu_custom_call.1} parent=1 // pred_check_branch
      %1949 = sbr.rel (0) target = $region85
    $region84: #{tpu_custom_call.1} parent=1 // pred_region
      %1951 = vsyncadd [#allocation16], 0
      %s1952 = sshll.u32 [#allocation17], 4
      %s1953 = int_to_ptr.vmem [resolvable:$true] %s1952
      %s1954 = sshll.u32 %s11, 4
      %s1955 = int_to_ptr.hbm [resolvable:$true] %s1954
      %1960 = dma.vmem_to_hbm [thread:$0]  %s1953, 2048, %s1955, [#allocation16], 128, 128, 8
    $region85: #{tpu_custom_call.1} parent=1 // pred_fallthru
      _
    // Predicated region
    $region86: #{tpu_custom_call.1} parent=1 // pred_check
      _
    $region87: #{tpu_custom_call.1} parent=1 // pred_check_branch
      %1962 = sbr.rel (0) target = $region89
    $region88: #{tpu_custom_call.1} parent=1 // pred_region
      %1964 = dma.done [#allocation5], 2048
    $region89: #{tpu_custom_call.1} parent=1 // pred_fallthru
      _
    // Predicated region
    $region90: #{tpu_custom_call.1} parent=1 // pred_check
      _
    $region91: #{tpu_custom_call.1} parent=1 // pred_check_branch
      %1966 = sbr.rel (0) target = $region93
    $region92: #{tpu_custom_call.1} parent=1 // pred_region
      %1968 = dma.done [#allocation16], 2048
    $region93: #{tpu_custom_call.1} parent=1 // pred_fallthru
      _
    // Predicated region
    $region94: #{tpu_custom_call.1} parent=1 // pred_check
      _
    $region95: #{tpu_custom_call.1} parent=1 // pred_check_branch
      %1970 = sbr.rel (0) target = $region97
    $region96: #{tpu_custom_call.1} parent=1 // pred_region
      %1972 = dma.done [#allocation16], 2048
    $region97: #{tpu_custom_call.1} parent=1 // pred_fallthru
      _
    %1973 = vsyncpa [#allocation4], 1
    %1974 = vsyncpa [#allocation7], 1
    %1975 = vsyncpa [#allocation10], 1
    %1976 = vsyncpa [#allocation13], 1
    %1977 = vsyncpa [#allocation5], 1
    %1978 = vsyncpa [#allocation16], 1

</llo_original>
